<compile_context>
chip_gen: v7x
topology: tpu7x:2x2x1
jax: 0.10.0
libtpu: 0.0.40
codegen_flags: <defaults>
</compile_context>

<pallas_src>
import functools

import jax
import jax.numpy as jnp
import numpy as np
from jax.experimental import pallas as pl
from jax.experimental.pallas import tpu as pltpu


def _round_up(x, m):
    return m * ((x + m - 1) // m)


def _vmem_limit_bytes():
    """Generation-aware scoped-VMEM limit with a safe fallback."""
    cap = None
    get_info = getattr(pltpu, "get_tpu_info", None)
    if get_info is not None:
        try:
            cap = getattr(get_info(), "vmem_capacity_bytes", None)
        except Exception:
            cap = None
    if not cap:
        return 48 * 1024 * 1024            # safe on every generation
    if cap >= 100 * 1024 * 1024:           # v5e / v6e: 128 MiB physical
        return 80 * 1024 * 1024
    return 40 * 1024 * 1024                # v7x: 64 MiB per TensorCore


def _pick_row_tile(H, Wp, Cin_p, Cout_p, out_itemsize, budget_bytes):
    """Largest TH (multiple of 8, TH*Wp >= 512 target) whose working set fits."""
    max_th = _round_up(H, 8)
    want = _round_up(max(-(-512 // Wp), 8), 8)
    th = min(max_th, want)

    def fits(t):
        hp = _round_up(H, t)
        img = 2 * (hp + 2) * (Wp + 2) * Cin_p * 2            # bf16 image, 2 bufs
        wgt = 2 * 9 * Cin_p * Cout_p * 2 + 2 * Cout_p * 4    # weights + bias
        outb = 2 * t * Wp * Cout_p * out_itemsize            # output, 2 bufs
        slab = t * Wp * 9 * Cin_p * 2                        # im2col scratch
        return img + wgt + outb + slab <= budget_bytes

    while th > 8 and not fits(th):
        th -= 8
    return max(th, 8)


def _cbr_kernel(x_ref, w_ref, bias_ref, o_ref, patches_ref, *,
                TH, Wp, Cin_p, Cout_p):
    # x_ref:       (1, Hp+2, Wp+2, Cin_p)  zero-padded NHWC image, bf16,
    #                                      resident across all H tiles of n.
    # w_ref:       (9*Cin_p, Cout_p)       BN-scale-folded conv weights, bf16.
    # bias_ref:    (1, Cout_p)             folded BN bias, f32.
    # o_ref:       (1, TH, Wp, Cout_p)     output row tile.
    # patches_ref: (TH, Wp, 9*Cin_p)       bf16 im2col scratch for this tile.
    h = pl.program_id(1)
    row0 = pl.multiple_of(h * TH, 8)       # TH is a multiple of 8

    # Build the im2col slab for this row tile; K laid out as (dy, dx, Cin_p),
    # so per-tap stores are lane-aligned whenever Cin_p % 128 == 0.
    # TODO(synk): use pltpu.roll on the sublane axis for the dx=1,2 shifts so
    # the relayout work stays on the XLU slot instead of hidden VMEM copies.
    for dy in range(3):
        for dx in range(3):
            k = dy * 3 + dx
            patches_ref[:, :, k * Cin_p:(k + 1) * Cin_p] = (
                x_ref[0, pl.ds(row0 + dy, TH), dx:dx + Wp, :])

    # One fat MXU matmul (K = 9*Cin_p), bf16 operands, f32 accumulation.
    patches = patches_ref[...].reshape(TH * Wp, 9 * Cin_p)
    acc = jnp.dot(patches, w_ref[...], preferred_element_type=jnp.float32)

    # Epilogue: folded-BN bias + ReLU (BN scale already folded into w_ref).
    y = jnp.maximum(acc + bias_ref[...], 0.0)
    o_ref[...] = y.reshape(1, TH, Wp, Cout_p).astype(o_ref.dtype)


@jax.jit
def cbr_forward(x_nchw, weight_oihw, gamma, beta, running_mean, running_var,
                eps=1e-5):
    """Conv2d(3x3, pad=1, bias=False) -> BatchNorm2d (eval) -> ReLU.

    x_nchw:      (N, Cin, H, W) float32
    weight_oihw: (Cout, Cin, 3, 3) float32 (PyTorch conv weight layout)
    returns:     (N, Cout, H, W) float32
    """
    N, Cin, H, W = x_nchw.shape
    Cout = weight_oihw.shape[0]

    # Channel padding policy (see header): lane-dense only where it pays off.
    Cout_p = _round_up(Cout, 128) if Cout >= 128 else Cout
    Cin_p = _round_up(Cin, 128) if Cin >= 64 else Cin
    Wp = _round_up(W, 8)

    vmem_limit = _vmem_limit_bytes()
    out_dtype = jnp.float32
    # TODO(synk): optionally emit bf16 output (cast at the store) to halve the
    # output HBM stream when downstream accuracy allows it.
    TH = _pick_row_tile(H, Wp, Cin_p, Cout_p, jnp.dtype(out_dtype).itemsize,
                        int(0.7 * vmem_limit))
    Hp = _round_up(H, TH)
    n_h = Hp // TH

    # One fused layout pass: NCHW->NHWC, halo pad + alignment pad + channel
    # pad, bf16 cast.  (jit fuses these into a single HBM round trip.)
    # TODO(synk): an NHWC-native (already padded, bf16) caller could skip this.
    x_nhwc = jnp.transpose(x_nchw, (0, 2, 3, 1))
    x_pad = jnp.pad(
        x_nhwc,
        ((0, 0), (1, 1 + Hp - H), (1, 1 + Wp - W), (0, Cin_p - Cin)),
    ).astype(jnp.bfloat16)

    # Fold eval-mode BN (running stats) into the conv weights / bias.
    # TODO(synk): training-mode BN (batch statistics) is not reproduced.
    scale = gamma / jnp.sqrt(running_var + eps)                  # (Cout,)
    bias = beta - running_mean * scale                           # (Cout,)
    w_hwio = jnp.transpose(weight_oihw, (2, 3, 1, 0))            # (3,3,Cin,Cout)
    w_hwio = jnp.pad(w_hwio * scale[None, None, None, :],
                     ((0, 0), (0, 0), (0, Cin_p - Cin), (0, Cout_p - Cout)))
    w_packed = w_hwio.reshape(9 * Cin_p, Cout_p).astype(jnp.bfloat16)
    bias_p = jnp.pad(bias.reshape(1, Cout),
                     ((0, 0), (0, Cout_p - Cout))).astype(jnp.float32)

    kernel = functools.partial(_cbr_kernel, TH=TH, Wp=Wp,
                               Cin_p=Cin_p, Cout_p=Cout_p)

    flops = 2 * N * Hp * Wp * 9 * Cin_p * Cout_p
    bytes_accessed = (N * (Hp + 2) * (Wp + 2) * Cin_p * 2
                      + 9 * Cin_p * Cout_p * 2 + Cout_p * 4
                      + N * Hp * Wp * Cout_p * jnp.dtype(out_dtype).itemsize)

    out_nhwc = pl.pallas_call(
        kernel,
        out_shape=jax.ShapeDtypeStruct((N, Hp, Wp, Cout_p), out_dtype),
        grid_spec=pltpu.PrefetchScalarGridSpec(
            num_scalar_prefetch=0,
            # TODO(synk): if N * n_h < 4 (e.g. N == 1 with a big TH) add a
            # parallel Cout-tile grid axis so both v7x TensorCores stay busy.
            grid=(N, n_h),
            in_specs=[
                # Whole padded image per batch element; the block index only
                # depends on n, so it is DMA'd once and stays resident across
                # that element's row tiles.
                # TODO(synk): for very large H*W*Cin switch to halo row blocks
                # (pl.ANY + pltpu.make_async_copy) so input VMEM scales with TH.
                pl.BlockSpec((1, Hp + 2, Wp + 2, Cin_p),
                             lambda n, h: (n, 0, 0, 0)),
                pl.BlockSpec((9 * Cin_p, Cout_p), lambda n, h: (0, 0)),
                pl.BlockSpec((1, Cout_p), lambda n, h: (0, 0)),
            ],
            out_specs=pl.BlockSpec((1, TH, Wp, Cout_p),
                                   lambda n, h: (n, h, 0, 0)),
            scratch_shapes=[pltpu.VMEM((TH, Wp, 9 * Cin_p), jnp.bfloat16)],
        ),
        compiler_params=pltpu.CompilerParams(
            dimension_semantics=("parallel", "parallel"),
            vmem_limit_bytes=vmem_limit,
        ),
        cost_estimate=pl.CostEstimate(
            flops=flops, transcendentals=0, bytes_accessed=bytes_accessed),
    )(x_pad, w_packed, bias_p)

    out = out_nhwc[:, :H, :W, :Cout]             # drop alignment padding
    return jnp.transpose(out, (0, 3, 1, 2))      # back to NCHW


def _reference(x_nchw, weight_oihw, gamma, beta, running_mean, running_var,
               eps=1e-5):
    """Pure-JAX f32 reference (lax conv) for correctness checking."""
    y = jax.lax.conv_general_dilated(
        x_nchw, weight_oihw,
        window_strides=(1, 1), padding=((1, 1), (1, 1)),
        dimension_numbers=("NCHW", "OIHW", "NCHW"),
    )
    scale = (gamma / jnp.sqrt(running_var + eps)).reshape(1, -1, 1, 1)
    bias = (beta - running_mean * gamma / jnp.sqrt(running_var + eps)).reshape(
        1, -1, 1, 1)
    return jnp.maximum(y * scale + bias, 0.0)


if __name__ == "__main__":
    key = jax.random.PRNGKey(0)
    kx, kw, kg, kb, km, kv = jax.random.split(key, 6)

    N, Cin, Cout, H, W = 2, 4, 8, 16, 16

    x = jax.random.normal(kx, (N, Cin, H, W), dtype=jnp.float32)
    weight = jax.random.normal(kw, (Cout, Cin, 3, 3), dtype=jnp.float32) * 0.1
    gamma = 1.0 + 0.1 * jax.random.normal(kg, (Cout,), dtype=jnp.float32)
    beta = 0.1 * jax.random.normal(kb, (Cout,), dtype=jnp.float32)
    running_mean = 0.1 * jax.random.normal(km, (Cout,), dtype=jnp.float32)
    running_var = 1.0 + 0.1 * jax.random.uniform(kv, (Cout,), dtype=jnp.float32)

    out = cbr_forward(x, weight, gamma, beta, running_mean, running_var)
    out = jax.block_until_ready(out)

    ref = _reference(x, weight, gamma, beta, running_mean, running_var)
    # bf16 input / weights / im2col in the kernel -> loosened tolerance vs f32.
    np.testing.assert_allclose(np.asarray(out), np.asarray(ref),
                               rtol=5e-2, atol=5e-2)
    print("KERNEL_OK")
</pallas_src>

<mosaic_0001>
module attributes {stable_mosaic.version = 11 : i64} {
  func.func @_cbr_kernel(%arg0: i32, %arg1: i32, %arg2: memref<1x18x18x4xbf16, #tpu.memory_space<vmem>>, %arg3: memref<36x8xbf16, #tpu.memory_space<vmem>>, %arg4: memref<1x8xf32, #tpu.memory_space<vmem>>, %arg5: memref<1x16x16x8xf32, #tpu.memory_space<vmem>>, %arg6: memref<16x16x36xbf16, #tpu.memory_space<vmem>>) attributes {dimension_semantics = [#tpu.dimension_semantics<parallel>, #tpu.dimension_semantics<parallel>], iteration_bounds = array<i64: 2, 1>, scalar_prefetch = 0 : i64, scratch_operands = 1 : i64, tpu.core_type = #tpu.core_type<tc>, window_params = [{transform_indices = @transform_0, window_bounds = array<i64: 1, 18, 18, 4>}, {pipeline_mode = #tpu.pipeline_mode<synchronous>, transform_indices = @transform_1, window_bounds = array<i64: 36, 8>}, {pipeline_mode = #tpu.pipeline_mode<synchronous>, transform_indices = @transform_2, window_bounds = array<i64: 1, 8>}, {transform_indices = @transform_3, window_bounds = array<i64: 1, 16, 16, 8>}]} {
    %c16_i32 = arith.constant 16 : i32
    %0 = arith.muli %arg1, %c16_i32 : i32
    %1 = tpu.assume_multiple %0, 8 : i32
    %c0_i32 = arith.constant 0 : i32
    %2 = arith.addi %1, %c0_i32 : i32
    %c0 = arith.constant 0 : index
    %3 = arith.index_cast %2 : i32 to index
    %c0_0 = arith.constant 0 : index
    %c0_1 = arith.constant 0 : index
    %4 = vector.load %arg2[%c0, %3, %c0_0, %c0_1] : memref<1x18x18x4xbf16, #tpu.memory_space<vmem>>, vector<1x16x16x4xbf16>
    %5 = vector.shape_cast %4 : vector<1x16x16x4xbf16> to vector<16x16x4xbf16>
    %c0_2 = arith.constant 0 : index
    %c0_3 = arith.constant 0 : index
    %c0_4 = arith.constant 0 : index
    %6 = vector.load %arg6[%c0_2, %c0_3, %c0_4] : memref<16x16x36xbf16, #tpu.memory_space<vmem>>, vector<16x16x4xbf16>
    tpu.vector_store %arg6[%c0_2, %c0_3, %c0_4], %5 {strides = array<i32>} : memref<16x16x36xbf16, #tpu.memory_space<vmem>>, vector<16x16x4xbf16>,
    %c0_i32_5 = arith.constant 0 : i32
    %7 = arith.addi %1, %c0_i32_5 : i32
    %c0_6 = arith.constant 0 : index
    %8 = arith.index_cast %7 : i32 to index
    %c1 = arith.constant 1 : index
    %c0_7 = arith.constant 0 : index
    %9 = vector.load %arg2[%c0_6, %8, %c1, %c0_7] : memref<1x18x18x4xbf16, #tpu.memory_space<vmem>>, vector<1x16x16x4xbf16>
    %10 = vector.shape_cast %9 : vector<1x16x16x4xbf16> to vector<16x16x4xbf16>
    %c0_8 = arith.constant 0 : index
    %c0_9 = arith.constant 0 : index
    %c4 = arith.constant 4 : index
    %11 = vector.load %arg6[%c0_8, %c0_9, %c4] : memref<16x16x36xbf16, #tpu.memory_space<vmem>>, vector<16x16x4xbf16>
    tpu.vector_store %arg6[%c0_8, %c0_9, %c4], %10 {strides = array<i32>} : memref<16x16x36xbf16, #tpu.memory_space<vmem>>, vector<16x16x4xbf16>,
    %c0_i32_10 = arith.constant 0 : i32
    %12 = arith.addi %1, %c0_i32_10 : i32
    %c0_11 = arith.constant 0 : index
    %13 = arith.index_cast %12 : i32 to index
    %c2 = arith.constant 2 : index
    %c0_12 = arith.constant 0 : index
    %14 = vector.load %arg2[%c0_11, %13, %c2, %c0_12] : memref<1x18x18x4xbf16, #tpu.memory_space<vmem>>, vector<1x16x16x4xbf16>
    %15 = vector.shape_cast %14 : vector<1x16x16x4xbf16> to vector<16x16x4xbf16>
    %c0_13 = arith.constant 0 : index
    %c0_14 = arith.constant 0 : index
    %c8 = arith.constant 8 : index
    %16 = vector.load %arg6[%c0_13, %c0_14, %c8] : memref<16x16x36xbf16, #tpu.memory_space<vmem>>, vector<16x16x4xbf16>
    tpu.vector_store %arg6[%c0_13, %c0_14, %c8], %15 {strides = array<i32>} : memref<16x16x36xbf16, #tpu.memory_space<vmem>>, vector<16x16x4xbf16>,
    %c1_i32 = arith.constant 1 : i32
    %17 = arith.addi %1, %c1_i32 : i32
    %c0_15 = arith.constant 0 : index
    %18 = arith.index_cast %17 : i32 to index
    %c0_16 = arith.constant 0 : index
    %c0_17 = arith.constant 0 : index
    %19 = vector.load %arg2[%c0_15, %18, %c0_16, %c0_17] : memref<1x18x18x4xbf16, #tpu.memory_space<vmem>>, vector<1x16x16x4xbf16>
    %20 = vector.shape_cast %19 : vector<1x16x16x4xbf16> to vector<16x16x4xbf16>
    %c0_18 = arith.constant 0 : index
    %c0_19 = arith.constant 0 : index
    %c12 = arith.constant 12 : index
    %21 = vector.load %arg6[%c0_18, %c0_19, %c12] : memref<16x16x36xbf16, #tpu.memory_space<vmem>>, vector<16x16x4xbf16>
    tpu.vector_store %arg6[%c0_18, %c0_19, %c12], %20 {strides = array<i32>} : memref<16x16x36xbf16, #tpu.memory_space<vmem>>, vector<16x16x4xbf16>,
    %c1_i32_20 = arith.constant 1 : i32
    %22 = arith.addi %1, %c1_i32_20 : i32
    %c0_21 = arith.constant 0 : index
    %23 = arith.index_cast %22 : i32 to index
    %c1_22 = arith.constant 1 : index
    %c0_23 = arith.constant 0 : index
    %24 = vector.load %arg2[%c0_21, %23, %c1_22, %c0_23] : memref<1x18x18x4xbf16, #tpu.memory_space<vmem>>, vector<1x16x16x4xbf16>
    %25 = vector.shape_cast %24 : vector<1x16x16x4xbf16> to vector<16x16x4xbf16>
    %c0_24 = arith.constant 0 : index
    %c0_25 = arith.constant 0 : index
    %c16 = arith.constant 16 : index
    %26 = vector.load %arg6[%c0_24, %c0_25, %c16] : memref<16x16x36xbf16, #tpu.memory_space<vmem>>, vector<16x16x4xbf16>
    tpu.vector_store %arg6[%c0_24, %c0_25, %c16], %25 {strides = array<i32>} : memref<16x16x36xbf16, #tpu.memory_space<vmem>>, vector<16x16x4xbf16>,
    %c1_i32_26 = arith.constant 1 : i32
    %27 = arith.addi %1, %c1_i32_26 : i32
    %c0_27 = arith.constant 0 : index
    %28 = arith.index_cast %27 : i32 to index
    %c2_28 = arith.constant 2 : index
    %c0_29 = arith.constant 0 : index
    %29 = vector.load %arg2[%c0_27, %28, %c2_28, %c0_29] : memref<1x18x18x4xbf16, #tpu.memory_space<vmem>>, vector<1x16x16x4xbf16>
    %30 = vector.shape_cast %29 : vector<1x16x16x4xbf16> to vector<16x16x4xbf16>
    %c0_30 = arith.constant 0 : index
    %c0_31 = arith.constant 0 : index
    %c20 = arith.constant 20 : index
    %31 = vector.load %arg6[%c0_30, %c0_31, %c20] : memref<16x16x36xbf16, #tpu.memory_space<vmem>>, vector<16x16x4xbf16>
    tpu.vector_store %arg6[%c0_30, %c0_31, %c20], %30 {strides = array<i32>} : memref<16x16x36xbf16, #tpu.memory_space<vmem>>, vector<16x16x4xbf16>,
    %c2_i32 = arith.constant 2 : i32
    %32 = arith.addi %1, %c2_i32 : i32
    %c0_32 = arith.constant 0 : index
    %33 = arith.index_cast %32 : i32 to index
    %c0_33 = arith.constant 0 : index
    %c0_34 = arith.constant 0 : index
    %34 = vector.load %arg2[%c0_32, %33, %c0_33, %c0_34] : memref<1x18x18x4xbf16, #tpu.memory_space<vmem>>, vector<1x16x16x4xbf16>
    %35 = vector.shape_cast %34 : vector<1x16x16x4xbf16> to vector<16x16x4xbf16>
    %c0_35 = arith.constant 0 : index
    %c0_36 = arith.constant 0 : index
    %c24 = arith.constant 24 : index
    %36 = vector.load %arg6[%c0_35, %c0_36, %c24] : memref<16x16x36xbf16, #tpu.memory_space<vmem>>, vector<16x16x4xbf16>
    tpu.vector_store %arg6[%c0_35, %c0_36, %c24], %35 {strides = array<i32>} : memref<16x16x36xbf16, #tpu.memory_space<vmem>>, vector<16x16x4xbf16>,
    %c2_i32_37 = arith.constant 2 : i32
    %37 = arith.addi %1, %c2_i32_37 : i32
    %c0_38 = arith.constant 0 : index
    %38 = arith.index_cast %37 : i32 to index
    %c1_39 = arith.constant 1 : index
    %c0_40 = arith.constant 0 : index
    %39 = vector.load %arg2[%c0_38, %38, %c1_39, %c0_40] : memref<1x18x18x4xbf16, #tpu.memory_space<vmem>>, vector<1x16x16x4xbf16>
    %40 = vector.shape_cast %39 : vector<1x16x16x4xbf16> to vector<16x16x4xbf16>
    %c0_41 = arith.constant 0 : index
    %c0_42 = arith.constant 0 : index
    %c28 = arith.constant 28 : index
    %41 = vector.load %arg6[%c0_41, %c0_42, %c28] : memref<16x16x36xbf16, #tpu.memory_space<vmem>>, vector<16x16x4xbf16>
    tpu.vector_store %arg6[%c0_41, %c0_42, %c28], %40 {strides = array<i32>} : memref<16x16x36xbf16, #tpu.memory_space<vmem>>, vector<16x16x4xbf16>,
    %c2_i32_43 = arith.constant 2 : i32
    %42 = arith.addi %1, %c2_i32_43 : i32
    %c0_44 = arith.constant 0 : index
    %43 = arith.index_cast %42 : i32 to index
    %c2_45 = arith.constant 2 : index
    %c0_46 = arith.constant 0 : index
    %44 = vector.load %arg2[%c0_44, %43, %c2_45, %c0_46] : memref<1x18x18x4xbf16, #tpu.memory_space<vmem>>, vector<1x16x16x4xbf16>
    %45 = vector.shape_cast %44 : vector<1x16x16x4xbf16> to vector<16x16x4xbf16>
    %c0_47 = arith.constant 0 : index
    %c0_48 = arith.constant 0 : index
    %c32 = arith.constant 32 : index
    %46 = vector.load %arg6[%c0_47, %c0_48, %c32] : memref<16x16x36xbf16, #tpu.memory_space<vmem>>, vector<16x16x4xbf16>
    tpu.vector_store %arg6[%c0_47, %c0_48, %c32], %45 {strides = array<i32>} : memref<16x16x36xbf16, #tpu.memory_space<vmem>>, vector<16x16x4xbf16>,
    %c0_49 = arith.constant 0 : index
    %c0_50 = arith.constant 0 : index
    %c0_51 = arith.constant 0 : index
    %47 = vector.load %arg6[%c0_49, %c0_50, %c0_51] : memref<16x16x36xbf16, #tpu.memory_space<vmem>>, vector<16x16x36xbf16>
    %48 = vector.shape_cast %47 : vector<16x16x36xbf16> to vector<256x36xbf16>
    %c0_52 = arith.constant 0 : index
    %c0_53 = arith.constant 0 : index
    %49 = vector.load %arg3[%c0_52, %c0_53] : memref<36x8xbf16, #tpu.memory_space<vmem>>, vector<36x8xbf16>
    %cst = arith.constant dense<0.000000e+00> : vector<256x8xf32>
    %50 = tpu.matmul %48, %49, %cst {dimension_numbers = #tpu.dot_dimension_numbers<[1], [0], [0], [1], [0, 0, 1, 1], [], []>} : vector<256x36xbf16>, vector<36x8xbf16>, vector<256x8xf32> -> vector<256x8xf32>
    %c0_54 = arith.constant 0 : index
    %c0_55 = arith.constant 0 : index
    %51 = vector.load %arg4[%c0_54, %c0_55] : memref<1x8xf32, #tpu.memory_space<vmem>>, vector<1x8xf32>
    %52 = vector.broadcast %51 : vector<1x8xf32> to vector<256x8xf32>
    %53 = arith.addf %50, %52 : vector<256x8xf32>
    %cst_56 = arith.constant 0.000000e+00 : f32
    %54 = vector.broadcast %cst_56 : f32 to vector<256x8xf32>
    %55 = arith.maximumf %53, %54 : vector<256x8xf32>
    %56 = vector.shape_cast %55 : vector<256x8xf32> to vector<1x16x16x8xf32>
    %c0_57 = arith.constant 0 : index
    %c0_58 = arith.constant 0 : index
    %c0_59 = arith.constant 0 : index
    %c0_60 = arith.constant 0 : index
    %57 = vector.load %arg5[%c0_57, %c0_58, %c0_59, %c0_60] : memref<1x16x16x8xf32, #tpu.memory_space<vmem>>, vector<1x16x16x8xf32>
    tpu.vector_store %arg5[%c0_57, %c0_58, %c0_59, %c0_60], %56 {strides = array<i32>} : memref<1x16x16x8xf32, #tpu.memory_space<vmem>>, vector<1x16x16x8xf32>,
    return
  }
  func.func @transform_0(%arg0: i32, %arg1: i32) -> (i32, i32, i32, i32) {
    %c0_i32 = arith.constant 0 : i32
    %c0_i32_0 = arith.constant 0 : i32
    %c0_i32_1 = arith.constant 0 : i32
    %c0_i32_2 = arith.constant 0 : i32
    return %arg0, %c0_i32, %c0_i32_0, %c0_i32_1 : i32, i32, i32, i32
  }
  func.func @transform_1(%arg0: i32, %arg1: i32) -> (i32, i32) {
    %c0_i32 = arith.constant 0 : i32
    %c0_i32_0 = arith.constant 0 : i32
    %c0_i32_1 = arith.constant 0 : i32
    return %c0_i32, %c0_i32_0 : i32, i32
  }
  func.func @transform_2(%arg0: i32, %arg1: i32) -> (i32, i32) {
    %c0_i32 = arith.constant 0 : i32
    %c0_i32_0 = arith.constant 0 : i32
    %c0_i32_1 = arith.constant 0 : i32
    return %c0_i32, %c0_i32_0 : i32, i32
  }
  func.func @transform_3(%arg0: i32, %arg1: i32) -> (i32, i32, i32, i32) {
    %c0_i32 = arith.constant 0 : i32
    %c0_i32_0 = arith.constant 0 : i32
    %c0_i32_1 = arith.constant 0 : i32
    return %arg0, %arg1, %c0_i32, %c0_i32_0 : i32, i32, i32, i32
  }
}

</mosaic_0001>

<llo_original>
// kernel: cbr_forward.1
$region0: #{cbr_forward.1}
  #allocation0 [shape = 'u32[]', space=smem, size = 0x4, offset = 0x4, fixed_abs, tag = 'smem constant byte address 0x4 - core index']
  #allocation1 [shape = 'u32[144,128]{1,0:T(1,128)}', space=vmem, size = 0x12000, scoped, tag = 'internal scratch']
  #allocation2 [shape = 'bf16[16,16,36]{2,1,0:T(16,128)(2,1)}', space=vmem, size = 0x10000, scoped, tag = 'scratch operand']
  %s0 = inlined_call_operand.vmem [shape: bf16[2,18,18,4], index: 0, kind: input, shape index: {}]
  %s1 = inlined_call_operand.vmem [shape: bf16[36,8], index: 1, kind: input, shape index: {}]
  %s2 = inlined_call_operand.vmem [shape: f32[1,8], index: 2, kind: input, shape index: {}]
  %s3 = inlined_call_operand.vmem [shape: f32[2,16,16,8], index: 3, kind: output, shape index: {}]
  %s4 = sld [smem:[#allocation0]]
  $region45: #{cbr_forward.1} parent=0
    _
  %s6 = ssub.s32 1, %s4
  %s7 = scalar_select 0, %s6, %s4
  loop: start=0, step=1, limit=4
  $region2: #{cbr_forward.1} parent=0 // loop_pre_header
    _
  $region3: #{cbr_forward.1} parent=0 // loop_header
    %s9 = sphi 0, %s13
    %p10 = scmp.ge.s32.totalorder %s9, 4
    %s16 = sphi 0, %s28
    %s17 = sphi 0, %s24
    %s18 = sphi 0, %s16
    %s19 = sphi 0, %s17
    %s20 = sphi 0, %s18
    %s21 = sphi 0, %s19
    %s31 = sphi 0, %s33
    %s34 = sphi 0, %s31
    %s35 = sphi 0, %s34
    %s51 = sphi 0, %s35
    %s55 = sphi 0, %s55
    %s57 = sphi 0, %s55
    %s58 = sphi 0, %s57
    %s72 = sphi 0, %s58
    %s76 = sphi 0, %s76
    %s78 = sphi 0, %s76
    %s79 = sphi 0, %s78
    %s93 = sphi 0, %s79
    %s101 = sphi 0, %s103
    %s104 = sphi 0, %s101
    %s105 = sphi 0, %s104
    %s121 = sphi 0, %s105
  $region4: #{cbr_forward.1} parent=0 // loop_header_branch
    %12 = sbr.rel (%p10) target = $region8
  $region5: #{cbr_forward.1} parent=0 // loop_body
    %s14 = ssub.s32 %s9, 1
    %s15 = ssub.s32 %s9, 2
    %s22 = sadd.s32 1, %s17
    %p23 = scmp.ge.s32.totalorder %s22, 1
    %s24 = scalar_select %p23, 0, %s22
    %s25 = sadd.s32 1, %s16
    %s26 = scalar_select %p23, %s25, %s16
    %p27 = scmp.ge.s32.totalorder %s26, 2
    %s28 = scalar_select %p27, 0, %s26
    %s29 = ssub.s32 %s16, %s28
    %p30 = scmp.eq.s32.totalorder %s29, 0
    %s32 = sadd.s32 %s31, 1
    %s33 = scalar_select %p30, %s31, %s32
    %p36 = pneg %p30
    %p37 = scmp.eq.s32.totalorder %s9, 1
    %p38 = por %p36, %p37
    %p39 = scmp.ne.s32.totalorder %s31, %s34
    %p40 = scmp.eq.s32.totalorder %s9, 0
    %p41 = por %p39, %p40
    %p42 = scmp.ne.s32.totalorder %s31, %s34
    %p43 = scmp.eq.s32.totalorder %s14, 1
    %p44 = por %p42, %p43
    %p45 = scmp.ne.s32.totalorder %s34, %s35
    %p46 = scmp.eq.s32.totalorder %s14, 0
    %p47 = por %p45, %p46
    %p48 = scmp.ne.s32.totalorder %s34, %s35
    %p49 = scmp.eq.s32.totalorder %s15, 1
    %p50 = por %p48, %p49
    %p52 = scmp.ne.s32.totalorder %s35, %s51
    %p53 = scmp.eq.s32.totalorder %s15, 0
    %p54 = por %p52, %p53
    %s56 = sadd.s32 %s55, 1
    %p59 = scmp.eq.s32.totalorder %s9, 1
    %p60 = scmp.ne.s32.totalorder %s55, %s57
    %p61 = scmp.eq.s32.totalorder %s9, 0
    %p62 = por %p60, %p61
    %p63 = scmp.ne.s32.totalorder %s55, %s57
    %p64 = scmp.eq.s32.totalorder %s14, 1
    %p65 = por %p63, %p64
    %p66 = scmp.ne.s32.totalorder %s57, %s58
    %p67 = scmp.eq.s32.totalorder %s14, 0
    %p68 = por %p66, %p67
    %p69 = scmp.ne.s32.totalorder %s57, %s58
    %p70 = scmp.eq.s32.totalorder %s15, 1
    %p71 = por %p69, %p70
    %p73 = scmp.ne.s32.totalorder %s58, %s72
    %p74 = scmp.eq.s32.totalorder %s15, 0
    %p75 = por %p73, %p74
    %s77 = sadd.s32 %s76, 1
    %p80 = scmp.eq.s32.totalorder %s9, 1
    %p81 = scmp.ne.s32.totalorder %s76, %s78
    %p82 = scmp.eq.s32.totalorder %s9, 0
    %p83 = por %p81, %p82
    %p84 = scmp.ne.s32.totalorder %s76, %s78
    %p85 = scmp.eq.s32.totalorder %s14, 1
    %p86 = por %p84, %p85
    %p87 = scmp.ne.s32.totalorder %s78, %s79
    %p88 = scmp.eq.s32.totalorder %s14, 0
    %p89 = por %p87, %p88
    %p90 = scmp.ne.s32.totalorder %s78, %s79
    %p91 = scmp.eq.s32.totalorder %s15, 1
    %p92 = por %p90, %p91
    %p94 = scmp.ne.s32.totalorder %s79, %s93
    %p95 = scmp.eq.s32.totalorder %s15, 0
    %p96 = por %p94, %p95
    %s97 = ssub.s32 %s16, %s28
    %s98 = ssub.s32 %s17, %s24
    %s99 = sor.u32 %s97, %s98
    %p100 = scmp.eq.s32.totalorder %s99, 0
    %s102 = sadd.s32 %s101, 1
    %s103 = scalar_select %p100, %s101, %s102
    %p106 = pneg %p100
    %p107 = scmp.eq.s32.totalorder %s9, 1
    %p108 = por %p106, %p107
    %p109 = scmp.ne.s32.totalorder %s101, %s104
    %p110 = scmp.eq.s32.totalorder %s9, 0
    %p111 = por %p109, %p110
    %p112 = scmp.ne.s32.totalorder %s101, %s104
    %p113 = scmp.eq.s32.totalorder %s14, 1
    %p114 = por %p112, %p113
    %p115 = scmp.ne.s32.totalorder %s104, %s105
    %p116 = scmp.eq.s32.totalorder %s14, 0
    %p117 = por %p115, %p116
    %p118 = scmp.ne.s32.totalorder %s104, %s105
    %p119 = scmp.eq.s32.totalorder %s15, 1
    %p120 = por %p118, %p119
    %p122 = scmp.ne.s32.totalorder %s105, %s121
    %p123 = scmp.eq.s32.totalorder %s15, 0
    %p124 = por %p122, %p123
    %p125 = scmp.le.s32.totalorder 1, %s9
    %p126 = scmp.lt.s32.totalorder %s9, 3
    %p127 = pnand %p125, %p126
    %p128 = pneg %p127
    // Predicated region
    $region9: #{cbr_forward.1} parent=5 // pred_check
      _
    $region10: #{cbr_forward.1} parent=5 // pred_check_branch
      %130 = sbr.rel (%p127) target = $region12
    $region11: #{cbr_forward.1} parent=5 // pred_region
      %s131 = ssub.s32 %s9, 1
      // Predicated region
      $region13: #{cbr_forward.1} parent=11 // pred_check
        %p132 = pneg %p68
      $region14: #{cbr_forward.1} parent=11 // pred_check_branch
        %134 = sbr.rel (%p132) target = $region16
      $region15: #{cbr_forward.1} parent=11 // pred_region
        _
      $region16: #{cbr_forward.1} parent=11 // pred_fallthru
        _
      // Predicated region
      $region17: #{cbr_forward.1} parent=11 // pred_check
        %p135 = pneg %p89
      $region18: #{cbr_forward.1} parent=11 // pred_check_branch
        %137 = sbr.rel (%p135) target = $region20
      $region19: #{cbr_forward.1} parent=11 // pred_region
        _
      $region20: #{cbr_forward.1} parent=11 // pred_fallthru
        _
    $region12: #{cbr_forward.1} parent=5 // pred_fallthru
      _
    %p138 = scmp.lt.s32.totalorder %s9, 2
    // Predicated region
    $region21: #{cbr_forward.1} parent=5 // pred_check
      %p139 = pneg %p138
    $region22: #{cbr_forward.1} parent=5 // pred_check_branch
      %141 = sbr.rel (%p139) target = $region24
    $region23: #{cbr_forward.1} parent=5 // pred_region
      // Predicated region
      $region25: #{cbr_forward.1} parent=23 // pred_check
        %p142 = pneg %p41
      $region26: #{cbr_forward.1} parent=23 // pred_check_branch
        %144 = sbr.rel (%p142) target = $region28
      $region27: #{cbr_forward.1} parent=23 // pred_region
        %p145 = scmp.lt.s32.totalorder %s16, 1
        %s146 = scalar_select %p145, %s16, 1
        %s147 = smul.addr %s146, 54
        %s148 = smul.addr %s147, 4
        %s149 = scalar_lea.vmem %s0, %s148
      $region28: #{cbr_forward.1} parent=23 // pred_fallthru
        _
    $region24: #{cbr_forward.1} parent=5 // pred_fallthru
      _
    %p150 = scmp.le.s32.totalorder 1, %s9
    %p151 = scmp.lt.s32.totalorder %s9, 3
    %p152 = pnand %p150, %p151
    %p153 = pneg %p152
    // Predicated region
    $region29: #{cbr_forward.1} parent=5 // pred_check
      _
    $region30: #{cbr_forward.1} parent=5 // pred_check_branch
      %155 = sbr.rel (%p152) target = $region32
    $region31: #{cbr_forward.1} parent=5 // pred_region
      %s156 = ssub.s32 %s9, 1
      %p157 = scmp.lt.s32.totalorder %s18, 1
      %s158 = scalar_select %p157, %s18, 1
      %s159 = smul.addr %s158, 54
      %s160 = smul.addr %s159, 4
      %s161 = scalar_lea.vmem %s0, %s160
      %p162 = pneg %p47
      %p163 = pneg %p44
      %p164 = pneg %p68
      %p165 = pneg %p65
      %p166 = pneg %p89
      %p167 = pneg %p86
      %p168 = pneg %p117
      %p169 = pneg %p114
      %s170 = smul.u32 16, %s19
      %p171 = scmp.lt.s32.totalorder %s18, 1
      %s172 = scalar_select %p171, %s18, 1
      %p173 = scmp.lt.s32.totalorder %s170, 15
      %s174 = scalar_select %p173, %s170, 15
      %s175 = smul.addr %s174, 2
      %s176 = smul.addr %s172, 32
      %s177 = sadd.s32 %s175, %s176
      %s178 = smul.addr %s177, 8
      %s179 = scalar_lea.vmem %s3, %s178
      %p180 = scmp.lt.s32.totalorder %s18, 1
      %s181 = scalar_select %p180, %s18, 1
      %s182 = smul.addr %s181, 54
      %s183 = smul.addr %s182, 4
      %s184 = scalar_lea.vmem %s0, %s183
      %s185 = smul.u32 16, %s19
      %p186 = scmp.lt.s32.totalorder %s18, 1
      %s187 = scalar_select %p186, %s18, 1
      %p188 = scmp.lt.s32.totalorder %s185, 15
      %s189 = scalar_select %p188, %s185, 15
      %s190 = smul.addr %s189, 2
      %s191 = smul.addr %s187, 32
      %s192 = sadd.s32 %s190, %s191
      %s193 = smul.addr %s192, 8
      %s194 = scalar_lea.vmem %s3, %s193
      %s195 = smul.u32 16, %s19
      %s197 = smul.u32 %s19, 16
      %s198 = smul.u32 %s197, 3
      %s199 = smul.addr %s198, 4
      %s200 = scalar_lea.vmem %s184, %s199
      %v201 = vld [vmem:[%s200] sm:$0xf]
      %v202 = vld [vmem:[%s200 + $0x4] sm:$0xf]
      %v203 = vld [vmem:[%s200 + $0xc] sm:$0xf]
      %v204 = vld [vmem:[%s200 + $0x10] sm:$0xf]
      %v205 = vld [vmem:[%s200 + $0x18] sm:$0xf]
      %v206 = vld [vmem:[%s200 + $0x1c] sm:$0xf]
      %v207 = vld [vmem:[%s200 + $0x24] sm:$0xf]
      %v208 = vld [vmem:[%s200 + $0x28] sm:$0xf]
      %v209 = vld [vmem:[%s200 + $0x30] sm:$0xf]
      %v210 = vld [vmem:[%s200 + $0x34] sm:$0xf]
      %v211 = vld [vmem:[%s200 + $0x3c] sm:$0xf]
      %v212 = vld [vmem:[%s200 + $0x40] sm:$0xf]
      %v213 = vld [vmem:[%s200 + $0x48] sm:$0xf]
      %v214 = vld [vmem:[%s200 + $0x4c] sm:$0xf]
      %v215 = vld [vmem:[%s200 + $0x54] sm:$0xf]
      %v216 = vld [vmem:[%s200 + $0x58] sm:$0xf]
      %v217 = vld [vmem:[%s200 + $0x60] sm:$0xf]
      %v218 = vld [vmem:[%s200 + $0x64] sm:$0xf]
      %v219 = vld [vmem:[%s200 + $0x6c] sm:$0xf]
      %v220 = vld [vmem:[%s200 + $0x70] sm:$0xf]
      %v221 = vld [vmem:[%s200 + $0x78] sm:$0xf]
      %v222 = vld [vmem:[%s200 + $0x7c] sm:$0xf]
      %v223 = vld [vmem:[%s200 + $0x84] sm:$0xf]
      %v224 = vld [vmem:[%s200 + $0x88] sm:$0xf]
      %v225 = vld [vmem:[%s200 + $0x90] sm:$0xf]
      %v226 = vld [vmem:[%s200 + $0x94] sm:$0xf]
      %v227 = vld [vmem:[%s200 + $0x9c] sm:$0xf]
      %v228 = vld [vmem:[%s200 + $0xa0] sm:$0xf]
      %v229 = vld [vmem:[%s200 + $0xa8] sm:$0xf]
      %v230 = vld [vmem:[%s200 + $0xac] sm:$0xf]
      %v231 = vld [vmem:[%s200 + $0xb4] sm:$0xf]
      %v232 = vld [vmem:[%s200 + $0xb8] sm:$0xf]
      %v265 = vunpack.c.l.b16 %v201
      %v266 = vunpack.c.l.b16 %v202
      %v267 = vunpack.c.l.b16 %v203
      %v268 = vunpack.c.l.b16 %v204
      %v269 = vunpack.c.l.b16 %v205
      %v270 = vunpack.c.l.b16 %v206
      %v271 = vunpack.c.l.b16 %v207
      %v272 = vunpack.c.l.b16 %v208
      %v273 = vunpack.c.l.b16 %v209
      %v274 = vunpack.c.l.b16 %v210
      %v275 = vunpack.c.l.b16 %v211
      %v276 = vunpack.c.l.b16 %v212
      %v277 = vunpack.c.l.b16 %v213
      %v278 = vunpack.c.l.b16 %v214
      %v279 = vunpack.c.l.b16 %v215
      %v280 = vunpack.c.l.b16 %v216
      %v281 = vunpack.c.l.b16 %v217
      %v282 = vunpack.c.l.b16 %v218
      %v283 = vunpack.c.l.b16 %v219
      %v284 = vunpack.c.l.b16 %v220
      %v285 = vunpack.c.l.b16 %v221
      %v286 = vunpack.c.l.b16 %v222
      %v287 = vunpack.c.l.b16 %v223
      %v288 = vunpack.c.l.b16 %v224
      %v289 = vunpack.c.l.b16 %v225
      %v290 = vunpack.c.l.b16 %v226
      %v291 = vunpack.c.l.b16 %v227
      %v292 = vunpack.c.l.b16 %v228
      %v293 = vunpack.c.l.b16 %v229
      %v294 = vunpack.c.l.b16 %v230
      %v295 = vunpack.c.l.b16 %v231
      %v296 = vunpack.c.l.b16 %v232
      %v297 = vpack.c.b16 %v266, %v265
      %v298 = vpack.c.b16 %v268, %v267
      %v299 = vpack.c.b16 %v270, %v269
      %v300 = vpack.c.b16 %v272, %v271
      %v301 = vpack.c.b16 %v274, %v273
      %v302 = vpack.c.b16 %v276, %v275
      %v303 = vpack.c.b16 %v278, %v277
      %v304 = vpack.c.b16 %v280, %v279
      %v305 = vpack.c.b16 %v282, %v281
      %v306 = vpack.c.b16 %v284, %v283
      %v307 = vpack.c.b16 %v286, %v285
      %v308 = vpack.c.b16 %v288, %v287
      %v309 = vpack.c.b16 %v290, %v289
      %v310 = vpack.c.b16 %v292, %v291
      %v311 = vpack.c.b16 %v294, %v293
      %v312 = vpack.c.b16 %v296, %v295
      %vm329 = vcmask 31744
      %330 = vst.msk [vmem:[#allocation2] sm:$0xff] %vm329, %v297
      %331 = vst.msk [vmem:[#allocation2 + $0x8] sm:$0xff] %vm329, %v298
      %332 = vst.msk [vmem:[#allocation2 + $0x10] sm:$0xff] %vm329, %v299
      %333 = vst.msk [vmem:[#allocation2 + $0x18] sm:$0xff] %vm329, %v300
      %334 = vst.msk [vmem:[#allocation2 + $0x20] sm:$0xff] %vm329, %v301
      %335 = vst.msk [vmem:[#allocation2 + $0x28] sm:$0xff] %vm329, %v302
      %336 = vst.msk [vmem:[#allocation2 + $0x30] sm:$0xff] %vm329, %v303
      %337 = vst.msk [vmem:[#allocation2 + $0x38] sm:$0xff] %vm329, %v304
      %338 = vst.msk [vmem:[#allocation2 + $0x40] sm:$0xff] %vm329, %v305
      %339 = vst.msk [vmem:[#allocation2 + $0x48] sm:$0xff] %vm329, %v306
      %340 = vst.msk [vmem:[#allocation2 + $0x50] sm:$0xff] %vm329, %v307
      %341 = vst.msk [vmem:[#allocation2 + $0x58] sm:$0xff] %vm329, %v308
      %342 = vst.msk [vmem:[#allocation2 + $0x60] sm:$0xff] %vm329, %v309
      %343 = vst.msk [vmem:[#allocation2 + $0x68] sm:$0xff] %vm329, %v310
      %344 = vst.msk [vmem:[#allocation2 + $0x70] sm:$0xff] %vm329, %v311
      %345 = vst.msk [vmem:[#allocation2 + $0x78] sm:$0xff] %vm329, %v312
      %v346 = vld [vmem:[%s200] sm:$0xf]
      %v347 = vld [vmem:[%s200 + $0x4] sm:$0xf]
      %v348 = vld [vmem:[%s200 + $0x8] sm:$0x1]
      %v349 = vld [vmem:[%s200 + $0xc] sm:$0xf]
      %v350 = vld [vmem:[%s200 + $0x10] sm:$0xf]
      %v351 = vld [vmem:[%s200 + $0x14] sm:$0x1]
      %v352 = vld [vmem:[%s200 + $0x18] sm:$0xf]
      %v353 = vld [vmem:[%s200 + $0x1c] sm:$0xf]
      %v354 = vld [vmem:[%s200 + $0x20] sm:$0x1]
      %v355 = vld [vmem:[%s200 + $0x24] sm:$0xf]
      %v356 = vld [vmem:[%s200 + $0x28] sm:$0xf]
      %v357 = vld [vmem:[%s200 + $0x2c] sm:$0x1]
      %v358 = vld [vmem:[%s200 + $0x30] sm:$0xf]
      %v359 = vld [vmem:[%s200 + $0x34] sm:$0xf]
      %v360 = vld [vmem:[%s200 + $0x38] sm:$0x1]
      %v361 = vld [vmem:[%s200 + $0x3c] sm:$0xf]
      %v362 = vld [vmem:[%s200 + $0x40] sm:$0xf]
      %v363 = vld [vmem:[%s200 + $0x44] sm:$0x1]
      %v364 = vld [vmem:[%s200 + $0x48] sm:$0xf]
      %v365 = vld [vmem:[%s200 + $0x4c] sm:$0xf]
      %v366 = vld [vmem:[%s200 + $0x50] sm:$0x1]
      %v367 = vld [vmem:[%s200 + $0x54] sm:$0xf]
      %v368 = vld [vmem:[%s200 + $0x58] sm:$0xf]
      %v369 = vld [vmem:[%s200 + $0x5c] sm:$0x1]
      %v370 = vld [vmem:[%s200 + $0x60] sm:$0xf]
      %v371 = vld [vmem:[%s200 + $0x64] sm:$0xf]
      %v372 = vld [vmem:[%s200 + $0x68] sm:$0x1]
      %v373 = vld [vmem:[%s200 + $0x6c] sm:$0xf]
      %v374 = vld [vmem:[%s200 + $0x70] sm:$0xf]
      %v375 = vld [vmem:[%s200 + $0x74] sm:$0x1]
      %v376 = vld [vmem:[%s200 + $0x78] sm:$0xf]
      %v377 = vld [vmem:[%s200 + $0x7c] sm:$0xf]
      %v378 = vld [vmem:[%s200 + $0x80] sm:$0x1]
      %v379 = vld [vmem:[%s200 + $0x84] sm:$0xf]
      %v380 = vld [vmem:[%s200 + $0x88] sm:$0xf]
      %v381 = vld [vmem:[%s200 + $0x8c] sm:$0x1]
      %v382 = vld [vmem:[%s200 + $0x90] sm:$0xf]
      %v383 = vld [vmem:[%s200 + $0x94] sm:$0xf]
      %v384 = vld [vmem:[%s200 + $0x98] sm:$0x1]
      %v385 = vld [vmem:[%s200 + $0x9c] sm:$0xf]
      %v386 = vld [vmem:[%s200 + $0xa0] sm:$0xf]
      %v387 = vld [vmem:[%s200 + $0xa4] sm:$0x1]
      %v388 = vld [vmem:[%s200 + $0xa8] sm:$0xf]
      %v389 = vld [vmem:[%s200 + $0xac] sm:$0xf]
      %v390 = vld [vmem:[%s200 + $0xb0] sm:$0x1]
      %v391 = vld [vmem:[%s200 + $0xb4] sm:$0xf]
      %v392 = vld [vmem:[%s200 + $0xb8] sm:$0xf]
      %v393 = vld [vmem:[%s200 + $0xbc] sm:$0x1]
      %v442 = vunpack.c.l.b16 %v346
      %v443 = vunpack.c.l.b16 %v347
      %v444 = vunpack.c.l.b16 %v348
      %v445 = vunpack.c.l.b16 %v349
      %v446 = vunpack.c.l.b16 %v350
      %v447 = vunpack.c.l.b16 %v351
      %v448 = vunpack.c.l.b16 %v352
      %v449 = vunpack.c.l.b16 %v353
      %v450 = vunpack.c.l.b16 %v354
      %v451 = vunpack.c.l.b16 %v355
      %v452 = vunpack.c.l.b16 %v356
      %v453 = vunpack.c.l.b16 %v357
      %v454 = vunpack.c.l.b16 %v358
      %v455 = vunpack.c.l.b16 %v359
      %v456 = vunpack.c.l.b16 %v360
      %v457 = vunpack.c.l.b16 %v361
      %v458 = vunpack.c.l.b16 %v362
      %v459 = vunpack.c.l.b16 %v363
      %v460 = vunpack.c.l.b16 %v364
      %v461 = vunpack.c.l.b16 %v365
      %v462 = vunpack.c.l.b16 %v366
      %v463 = vunpack.c.l.b16 %v367
      %v464 = vunpack.c.l.b16 %v368
      %v465 = vunpack.c.l.b16 %v369
      %v466 = vunpack.c.l.b16 %v370
      %v467 = vunpack.c.l.b16 %v371
      %v468 = vunpack.c.l.b16 %v372
      %v469 = vunpack.c.l.b16 %v373
      %v470 = vunpack.c.l.b16 %v374
      %v471 = vunpack.c.l.b16 %v375
      %v472 = vunpack.c.l.b16 %v376
      %v473 = vunpack.c.l.b16 %v377
      %v474 = vunpack.c.l.b16 %v378
      %v475 = vunpack.c.l.b16 %v379
      %v476 = vunpack.c.l.b16 %v380
      %v477 = vunpack.c.l.b16 %v381
      %v478 = vunpack.c.l.b16 %v382
      %v479 = vunpack.c.l.b16 %v383
      %v480 = vunpack.c.l.b16 %v384
      %v481 = vunpack.c.l.b16 %v385
      %v482 = vunpack.c.l.b16 %v386
      %v483 = vunpack.c.l.b16 %v387
      %v484 = vunpack.c.l.b16 %v388
      %v485 = vunpack.c.l.b16 %v389
      %v486 = vunpack.c.l.b16 %v390
      %v487 = vunpack.c.l.b16 %v391
      %v488 = vunpack.c.l.b16 %v392
      %v489 = vunpack.c.l.b16 %v393
      %v490 = vpack.c.b16 %v443, %v442
      %v491 = vpack.c.b16 %v444, %v444
      %v492 = vpack.c.b16 %v446, %v445
      %v493 = vpack.c.b16 %v447, %v447
      %v494 = vpack.c.b16 %v449, %v448
      %v495 = vpack.c.b16 %v450, %v450
      %v496 = vpack.c.b16 %v452, %v451
      %v497 = vpack.c.b16 %v453, %v453
      %v498 = vpack.c.b16 %v455, %v454
      %v499 = vpack.c.b16 %v456, %v456
      %v500 = vpack.c.b16 %v458, %v457
      %v501 = vpack.c.b16 %v459, %v459
      %v502 = vpack.c.b16 %v461, %v460
      %v503 = vpack.c.b16 %v462, %v462
      %v504 = vpack.c.b16 %v464, %v463
      %v505 = vpack.c.b16 %v465, %v465
      %v506 = vpack.c.b16 %v467, %v466
      %v507 = vpack.c.b16 %v468, %v468
      %v508 = vpack.c.b16 %v470, %v469
      %v509 = vpack.c.b16 %v471, %v471
      %v510 = vpack.c.b16 %v473, %v472
      %v511 = vpack.c.b16 %v474, %v474
      %v512 = vpack.c.b16 %v476, %v475
      %v513 = vpack.c.b16 %v477, %v477
      %v514 = vpack.c.b16 %v479, %v478
      %v515 = vpack.c.b16 %v480, %v480
      %v516 = vpack.c.b16 %v482, %v481
      %v517 = vpack.c.b16 %v483, %v483
      %v518 = vpack.c.b16 %v485, %v484
      %v519 = vpack.c.b16 %v486, %v486
      %v520 = vpack.c.b16 %v488, %v487
      %v521 = vpack.c.b16 %v489, %v489
      %vm522 = vsmask.f32 7424
      %v524 = vshrl.u32 %v490, 16
      %v526 = vshll.u32 %v490, 16
      %v528 = vrot.slane %v526, 1
      %v529 = vor.u32 %v524, %v528
      %v531 = vshll.u32 %v491, 16
      %v533 = vrot.slane %v531, 1
      %v534 = vsel %vm522, %v529, %v533
      %v536 = vshrl.u32 %v492, 16
      %v538 = vshll.u32 %v492, 16
      %v540 = vrot.slane %v538, 1
      %v541 = vor.u32 %v536, %v540
      %v543 = vshll.u32 %v493, 16
      %v545 = vrot.slane %v543, 1
      %v546 = vsel %vm522, %v541, %v545
      %v548 = vshrl.u32 %v494, 16
      %v550 = vshll.u32 %v494, 16
      %v552 = vrot.slane %v550, 1
      %v553 = vor.u32 %v548, %v552
      %v555 = vshll.u32 %v495, 16
      %v557 = vrot.slane %v555, 1
      %v558 = vsel %vm522, %v553, %v557
      %v560 = vshrl.u32 %v496, 16
      %v562 = vshll.u32 %v496, 16
      %v564 = vrot.slane %v562, 1
      %v565 = vor.u32 %v560, %v564
      %v567 = vshll.u32 %v497, 16
      %v569 = vrot.slane %v567, 1
      %v570 = vsel %vm522, %v565, %v569
      %v572 = vshrl.u32 %v498, 16
      %v574 = vshll.u32 %v498, 16
      %v576 = vrot.slane %v574, 1
      %v577 = vor.u32 %v572, %v576
      %v579 = vshll.u32 %v499, 16
      %v581 = vrot.slane %v579, 1
      %v582 = vsel %vm522, %v577, %v581
      %v584 = vshrl.u32 %v500, 16
      %v586 = vshll.u32 %v500, 16
      %v588 = vrot.slane %v586, 1
      %v589 = vor.u32 %v584, %v588
      %v591 = vshll.u32 %v501, 16
      %v593 = vrot.slane %v591, 1
      %v594 = vsel %vm522, %v589, %v593
      %v596 = vshrl.u32 %v502, 16
      %v598 = vshll.u32 %v502, 16
      %v600 = vrot.slane %v598, 1
      %v601 = vor.u32 %v596, %v600
      %v603 = vshll.u32 %v503, 16
      %v605 = vrot.slane %v603, 1
      %v606 = vsel %vm522, %v601, %v605
      %v608 = vshrl.u32 %v504, 16
      %v610 = vshll.u32 %v504, 16
      %v612 = vrot.slane %v610, 1
      %v613 = vor.u32 %v608, %v612
      %v615 = vshll.u32 %v505, 16
      %v617 = vrot.slane %v615, 1
      %v618 = vsel %vm522, %v613, %v617
      %v620 = vshrl.u32 %v506, 16
      %v622 = vshll.u32 %v506, 16
      %v624 = vrot.slane %v622, 1
      %v625 = vor.u32 %v620, %v624
      %v627 = vshll.u32 %v507, 16
      %v629 = vrot.slane %v627, 1
      %v630 = vsel %vm522, %v625, %v629
      %v632 = vshrl.u32 %v508, 16
      %v634 = vshll.u32 %v508, 16
      %v636 = vrot.slane %v634, 1
      %v637 = vor.u32 %v632, %v636
      %v639 = vshll.u32 %v509, 16
      %v641 = vrot.slane %v639, 1
      %v642 = vsel %vm522, %v637, %v641
      %v644 = vshrl.u32 %v510, 16
      %v646 = vshll.u32 %v510, 16
      %v648 = vrot.slane %v646, 1
      %v649 = vor.u32 %v644, %v648
      %v651 = vshll.u32 %v511, 16
      %v653 = vrot.slane %v651, 1
      %v654 = vsel %vm522, %v649, %v653
      %v656 = vshrl.u32 %v512, 16
      %v658 = vshll.u32 %v512, 16
      %v660 = vrot.slane %v658, 1
      %v661 = vor.u32 %v656, %v660
      %v663 = vshll.u32 %v513, 16
      %v665 = vrot.slane %v663, 1
      %v666 = vsel %vm522, %v661, %v665
      %v668 = vshrl.u32 %v514, 16
      %v670 = vshll.u32 %v514, 16
      %v672 = vrot.slane %v670, 1
      %v673 = vor.u32 %v668, %v672
      %v675 = vshll.u32 %v515, 16
      %v677 = vrot.slane %v675, 1
      %v678 = vsel %vm522, %v673, %v677
      %v680 = vshrl.u32 %v516, 16
      %v682 = vshll.u32 %v516, 16
      %v684 = vrot.slane %v682, 1
      %v685 = vor.u32 %v680, %v684
      %v687 = vshll.u32 %v517, 16
      %v689 = vrot.slane %v687, 1
      %v690 = vsel %vm522, %v685, %v689
      %v692 = vshrl.u32 %v518, 16
      %v694 = vshll.u32 %v518, 16
      %v696 = vrot.slane %v694, 1
      %v697 = vor.u32 %v692, %v696
      %v699 = vshll.u32 %v519, 16
      %v701 = vrot.slane %v699, 1
      %v702 = vsel %vm522, %v697, %v701
      %v704 = vshrl.u32 %v520, 16
      %v706 = vshll.u32 %v520, 16
      %v708 = vrot.slane %v706, 1
      %v709 = vor.u32 %v704, %v708
      %v711 = vshll.u32 %v521, 16
      %v713 = vrot.slane %v711, 1
      %v714 = vsel %vm522, %v709, %v713
      %715 = vrot.lane.b32.xlu0 %v534, 4
      %v716 = vpop.permute.xlu0 %715
      %717 = vrot.lane.b32.xlu0 %v546, 4
      %v718 = vpop.permute.xlu0 %717
      %719 = vrot.lane.b32.xlu0 %v558, 4
      %v720 = vpop.permute.xlu0 %719
      %721 = vrot.lane.b32.xlu0 %v570, 4
      %v722 = vpop.permute.xlu0 %721
      %723 = vrot.lane.b32.xlu0 %v582, 4
      %v724 = vpop.permute.xlu0 %723
      %725 = vrot.lane.b32.xlu0 %v594, 4
      %v726 = vpop.permute.xlu0 %725
      %727 = vrot.lane.b32.xlu0 %v606, 4
      %v728 = vpop.permute.xlu0 %727
      %729 = vrot.lane.b32.xlu0 %v618, 4
      %v730 = vpop.permute.xlu0 %729
      %731 = vrot.lane.b32.xlu0 %v630, 4
      %v732 = vpop.permute.xlu0 %731
      %733 = vrot.lane.b32.xlu0 %v642, 4
      %v734 = vpop.permute.xlu0 %733
      %735 = vrot.lane.b32.xlu0 %v654, 4
      %v736 = vpop.permute.xlu0 %735
      %737 = vrot.lane.b32.xlu0 %v666, 4
      %v738 = vpop.permute.xlu0 %737
      %739 = vrot.lane.b32.xlu0 %v678, 4
      %v740 = vpop.permute.xlu0 %739
      %741 = vrot.lane.b32.xlu0 %v690, 4
      %v742 = vpop.permute.xlu0 %741
      %743 = vrot.lane.b32.xlu0 %v702, 4
      %v744 = vpop.permute.xlu0 %743
      %745 = vrot.lane.b32.xlu0 %v714, 4
      %v746 = vpop.permute.xlu0 %745
      %vm763 = vcmask 64544
      %764 = vst.msk [vmem:[#allocation2] sm:$0xff] %vm763, %v716
      %765 = vst.msk [vmem:[#allocation2 + $0x8] sm:$0xff] %vm763, %v718
      %766 = vst.msk [vmem:[#allocation2 + $0x10] sm:$0xff] %vm763, %v720
      %767 = vst.msk [vmem:[#allocation2 + $0x18] sm:$0xff] %vm763, %v722
      %768 = vst.msk [vmem:[#allocation2 + $0x20] sm:$0xff] %vm763, %v724
      %769 = vst.msk [vmem:[#allocation2 + $0x28] sm:$0xff] %vm763, %v726
      %770 = vst.msk [vmem:[#allocation2 + $0x30] sm:$0xff] %vm763, %v728
      %771 = vst.msk [vmem:[#allocation2 + $0x38] sm:$0xff] %vm763, %v730
      %772 = vst.msk [vmem:[#allocation2 + $0x40] sm:$0xff] %vm763, %v732
      %773 = vst.msk [vmem:[#allocation2 + $0x48] sm:$0xff] %vm763, %v734
      %774 = vst.msk [vmem:[#allocation2 + $0x50] sm:$0xff] %vm763, %v736
      %775 = vst.msk [vmem:[#allocation2 + $0x58] sm:$0xff] %vm763, %v738
      %776 = vst.msk [vmem:[#allocation2 + $0x60] sm:$0xff] %vm763, %v740
      %777 = vst.msk [vmem:[#allocation2 + $0x68] sm:$0xff] %vm763, %v742
      %778 = vst.msk [vmem:[#allocation2 + $0x70] sm:$0xff] %vm763, %v744
      %779 = vst.msk [vmem:[#allocation2 + $0x78] sm:$0xff] %vm763, %v746
      %v780 = vld [vmem:[%s200] sm:$0xe]
      %v781 = vld [vmem:[%s200 + $0x4] sm:$0xf]
      %v782 = vld [vmem:[%s200 + $0x8] sm:$0x1]
      %v783 = vld [vmem:[%s200 + $0xc] sm:$0xe]
      %v784 = vld [vmem:[%s200 + $0x10] sm:$0xf]
      %v785 = vld [vmem:[%s200 + $0x14] sm:$0x1]
      %v786 = vld [vmem:[%s200 + $0x18] sm:$0xe]
      %v787 = vld [vmem:[%s200 + $0x1c] sm:$0xf]
      %v788 = vld [vmem:[%s200 + $0x20] sm:$0x1]
      %v789 = vld [vmem:[%s200 + $0x24] sm:$0xe]
      %v790 = vld [vmem:[%s200 + $0x28] sm:$0xf]
      %v791 = vld [vmem:[%s200 + $0x2c] sm:$0x1]
      %v792 = vld [vmem:[%s200 + $0x30] sm:$0xe]
      %v793 = vld [vmem:[%s200 + $0x34] sm:$0xf]
      %v794 = vld [vmem:[%s200 + $0x38] sm:$0x1]
      %v795 = vld [vmem:[%s200 + $0x3c] sm:$0xe]
      %v796 = vld [vmem:[%s200 + $0x40] sm:$0xf]
      %v797 = vld [vmem:[%s200 + $0x44] sm:$0x1]
      %v798 = vld [vmem:[%s200 + $0x48] sm:$0xe]
      %v799 = vld [vmem:[%s200 + $0x4c] sm:$0xf]
      %v800 = vld [vmem:[%s200 + $0x50] sm:$0x1]
      %v801 = vld [vmem:[%s200 + $0x54] sm:$0xe]
      %v802 = vld [vmem:[%s200 + $0x58] sm:$0xf]
      %v803 = vld [vmem:[%s200 + $0x5c] sm:$0x1]
      %v804 = vld [vmem:[%s200 + $0x60] sm:$0xe]
      %v805 = vld [vmem:[%s200 + $0x64] sm:$0xf]
      %v806 = vld [vmem:[%s200 + $0x68] sm:$0x1]
      %v807 = vld [vmem:[%s200 + $0x6c] sm:$0xe]
      %v808 = vld [vmem:[%s200 + $0x70] sm:$0xf]
      %v809 = vld [vmem:[%s200 + $0x74] sm:$0x1]
      %v810 = vld [vmem:[%s200 + $0x78] sm:$0xe]
      %v811 = vld [vmem:[%s200 + $0x7c] sm:$0xf]
      %v812 = vld [vmem:[%s200 + $0x80] sm:$0x1]
      %v813 = vld [vmem:[%s200 + $0x84] sm:$0xe]
      %v814 = vld [vmem:[%s200 + $0x88] sm:$0xf]
      %v815 = vld [vmem:[%s200 + $0x8c] sm:$0x1]
      %v816 = vld [vmem:[%s200 + $0x90] sm:$0xe]
      %v817 = vld [vmem:[%s200 + $0x94] sm:$0xf]
      %v818 = vld [vmem:[%s200 + $0x98] sm:$0x1]
      %v819 = vld [vmem:[%s200 + $0x9c] sm:$0xe]
      %v820 = vld [vmem:[%s200 + $0xa0] sm:$0xf]
      %v821 = vld [vmem:[%s200 + $0xa4] sm:$0x1]
      %v822 = vld [vmem:[%s200 + $0xa8] sm:$0xe]
      %v823 = vld [vmem:[%s200 + $0xac] sm:$0xf]
      %v824 = vld [vmem:[%s200 + $0xb0] sm:$0x1]
      %v825 = vld [vmem:[%s200 + $0xb4] sm:$0xe]
      %v826 = vld [vmem:[%s200 + $0xb8] sm:$0xf]
      %v827 = vld [vmem:[%s200 + $0xbc] sm:$0x1]
      %v876 = vunpack.c.l.b16 %v780
      %v877 = vunpack.c.l.b16 %v781
      %v878 = vunpack.c.l.b16 %v782
      %v879 = vunpack.c.l.b16 %v783
      %v880 = vunpack.c.l.b16 %v784
      %v881 = vunpack.c.l.b16 %v785
      %v882 = vunpack.c.l.b16 %v786
      %v883 = vunpack.c.l.b16 %v787
      %v884 = vunpack.c.l.b16 %v788
      %v885 = vunpack.c.l.b16 %v789
      %v886 = vunpack.c.l.b16 %v790
      %v887 = vunpack.c.l.b16 %v791
      %v888 = vunpack.c.l.b16 %v792
      %v889 = vunpack.c.l.b16 %v793
      %v890 = vunpack.c.l.b16 %v794
      %v891 = vunpack.c.l.b16 %v795
      %v892 = vunpack.c.l.b16 %v796
      %v893 = vunpack.c.l.b16 %v797
      %v894 = vunpack.c.l.b16 %v798
      %v895 = vunpack.c.l.b16 %v799
      %v896 = vunpack.c.l.b16 %v800
      %v897 = vunpack.c.l.b16 %v801
      %v898 = vunpack.c.l.b16 %v802
      %v899 = vunpack.c.l.b16 %v803
      %v900 = vunpack.c.l.b16 %v804
      %v901 = vunpack.c.l.b16 %v805
      %v902 = vunpack.c.l.b16 %v806
      %v903 = vunpack.c.l.b16 %v807
      %v904 = vunpack.c.l.b16 %v808
      %v905 = vunpack.c.l.b16 %v809
      %v906 = vunpack.c.l.b16 %v810
      %v907 = vunpack.c.l.b16 %v811
      %v908 = vunpack.c.l.b16 %v812
      %v909 = vunpack.c.l.b16 %v813
      %v910 = vunpack.c.l.b16 %v814
      %v911 = vunpack.c.l.b16 %v815
      %v912 = vunpack.c.l.b16 %v816
      %v913 = vunpack.c.l.b16 %v817
      %v914 = vunpack.c.l.b16 %v818
      %v915 = vunpack.c.l.b16 %v819
      %v916 = vunpack.c.l.b16 %v820
      %v917 = vunpack.c.l.b16 %v821
      %v918 = vunpack.c.l.b16 %v822
      %v919 = vunpack.c.l.b16 %v823
      %v920 = vunpack.c.l.b16 %v824
      %v921 = vunpack.c.l.b16 %v825
      %v922 = vunpack.c.l.b16 %v826
      %v923 = vunpack.c.l.b16 %v827
      %v924 = vpack.c.b16 %v877, %v876
      %v925 = vpack.c.b16 %v878, %v878
      %v926 = vpack.c.b16 %v880, %v879
      %v927 = vpack.c.b16 %v881, %v881
      %v928 = vpack.c.b16 %v883, %v882
      %v929 = vpack.c.b16 %v884, %v884
      %v930 = vpack.c.b16 %v886, %v885
      %v931 = vpack.c.b16 %v887, %v887
      %v932 = vpack.c.b16 %v889, %v888
      %v933 = vpack.c.b16 %v890, %v890
      %v934 = vpack.c.b16 %v892, %v891
      %v935 = vpack.c.b16 %v893, %v893
      %v936 = vpack.c.b16 %v895, %v894
      %v937 = vpack.c.b16 %v896, %v896
      %v938 = vpack.c.b16 %v898, %v897
      %v939 = vpack.c.b16 %v899, %v899
      %v940 = vpack.c.b16 %v901, %v900
      %v941 = vpack.c.b16 %v902, %v902
      %v942 = vpack.c.b16 %v904, %v903
      %v943 = vpack.c.b16 %v905, %v905
      %v944 = vpack.c.b16 %v907, %v906
      %v945 = vpack.c.b16 %v908, %v908
      %v946 = vpack.c.b16 %v910, %v909
      %v947 = vpack.c.b16 %v911, %v911
      %v948 = vpack.c.b16 %v913, %v912
      %v949 = vpack.c.b16 %v914, %v914
      %v950 = vpack.c.b16 %v916, %v915
      %v951 = vpack.c.b16 %v917, %v917
      %v952 = vpack.c.b16 %v919, %v918
      %v953 = vpack.c.b16 %v920, %v920
      %v954 = vpack.c.b16 %v922, %v921
      %v955 = vpack.c.b16 %v923, %v923
      %vm956 = vcmask 1046528
      %v957 = vrot.slane %v924, 1
      %v958 = vrot.slane %v925, 1
      %v959 = vsel %vm956, %v957, %v958
      %v960 = vrot.slane %v926, 1
      %v961 = vrot.slane %v927, 1
      %v962 = vsel %vm956, %v960, %v961
      %v963 = vrot.slane %v928, 1
      %v964 = vrot.slane %v929, 1
      %v965 = vsel %vm956, %v963, %v964
      %v966 = vrot.slane %v930, 1
      %v967 = vrot.slane %v931, 1
      %v968 = vsel %vm956, %v966, %v967
      %v969 = vrot.slane %v932, 1
      %v970 = vrot.slane %v933, 1
      %v971 = vsel %vm956, %v969, %v970
      %v972 = vrot.slane %v934, 1
      %v973 = vrot.slane %v935, 1
      %v974 = vsel %vm956, %v972, %v973
      %v975 = vrot.slane %v936, 1
      %v976 = vrot.slane %v937, 1
      %v977 = vsel %vm956, %v975, %v976
      %v978 = vrot.slane %v938, 1
      %v979 = vrot.slane %v939, 1
      %v980 = vsel %vm956, %v978, %v979
      %v981 = vrot.slane %v940, 1
      %v982 = vrot.slane %v941, 1
      %v983 = vsel %vm956, %v981, %v982
      %v984 = vrot.slane %v942, 1
      %v985 = vrot.slane %v943, 1
      %v986 = vsel %vm956, %v984, %v985
      %v987 = vrot.slane %v944, 1
      %v988 = vrot.slane %v945, 1
      %v989 = vsel %vm956, %v987, %v988
      %v990 = vrot.slane %v946, 1
      %v991 = vrot.slane %v947, 1
      %v992 = vsel %vm956, %v990, %v991
      %v993 = vrot.slane %v948, 1
      %v994 = vrot.slane %v949, 1
      %v995 = vsel %vm956, %v993, %v994
      %v996 = vrot.slane %v950, 1
      %v997 = vrot.slane %v951, 1
      %v998 = vsel %vm956, %v996, %v997
      %v999 = vrot.slane %v952, 1
      %v1000 = vrot.slane %v953, 1
      %v1001 = vsel %vm956, %v999, %v1000
      %v1002 = vrot.slane %v954, 1
      %v1003 = vrot.slane %v955, 1
      %v1004 = vsel %vm956, %v1002, %v1003
      %1005 = vrot.lane.b32.xlu0 %v959, 8
      %v1006 = vpop.permute.xlu0 %1005
      %1007 = vrot.lane.b32.xlu0 %v962, 8
      %v1008 = vpop.permute.xlu0 %1007
      %1009 = vrot.lane.b32.xlu0 %v965, 8
      %v1010 = vpop.permute.xlu0 %1009
      %1011 = vrot.lane.b32.xlu0 %v968, 8
      %v1012 = vpop.permute.xlu0 %1011
      %1013 = vrot.lane.b32.xlu0 %v971, 8
      %v1014 = vpop.permute.xlu0 %1013
      %1015 = vrot.lane.b32.xlu0 %v974, 8
      %v1016 = vpop.permute.xlu0 %1015
      %1017 = vrot.lane.b32.xlu0 %v977, 8
      %v1018 = vpop.permute.xlu0 %1017
      %1019 = vrot.lane.b32.xlu0 %v980, 8
      %v1020 = vpop.permute.xlu0 %1019
      %1021 = vrot.lane.b32.xlu0 %v983, 8
      %v1022 = vpop.permute.xlu0 %1021
      %1023 = vrot.lane.b32.xlu0 %v986, 8
      %v1024 = vpop.permute.xlu0 %1023
      %1025 = vrot.lane.b32.xlu0 %v989, 8
      %v1026 = vpop.permute.xlu0 %1025
      %1027 = vrot.lane.b32.xlu0 %v992, 8
      %v1028 = vpop.permute.xlu0 %1027
      %1029 = vrot.lane.b32.xlu0 %v995, 8
      %v1030 = vpop.permute.xlu0 %1029
      %1031 = vrot.lane.b32.xlu0 %v998, 8
      %v1032 = vpop.permute.xlu0 %1031
      %1033 = vrot.lane.b32.xlu0 %v1001, 8
      %v1034 = vpop.permute.xlu0 %1033
      %1035 = vrot.lane.b32.xlu0 %v1004, 8
      %v1036 = vpop.permute.xlu0 %1035
      %vm1053 = vcmask 97344
      %1054 = vst.msk [vmem:[#allocation2] sm:$0xff] %vm1053, %v1006
      %1055 = vst.msk [vmem:[#allocation2 + $0x8] sm:$0xff] %vm1053, %v1008
      %1056 = vst.msk [vmem:[#allocation2 + $0x10] sm:$0xff] %vm1053, %v1010
      %1057 = vst.msk [vmem:[#allocation2 + $0x18] sm:$0xff] %vm1053, %v1012
      %1058 = vst.msk [vmem:[#allocation2 + $0x20] sm:$0xff] %vm1053, %v1014
      %1059 = vst.msk [vmem:[#allocation2 + $0x28] sm:$0xff] %vm1053, %v1016
      %1060 = vst.msk [vmem:[#allocation2 + $0x30] sm:$0xff] %vm1053, %v1018
      %1061 = vst.msk [vmem:[#allocation2 + $0x38] sm:$0xff] %vm1053, %v1020
      %1062 = vst.msk [vmem:[#allocation2 + $0x40] sm:$0xff] %vm1053, %v1022
      %1063 = vst.msk [vmem:[#allocation2 + $0x48] sm:$0xff] %vm1053, %v1024
      %1064 = vst.msk [vmem:[#allocation2 + $0x50] sm:$0xff] %vm1053, %v1026
      %1065 = vst.msk [vmem:[#allocation2 + $0x58] sm:$0xff] %vm1053, %v1028
      %1066 = vst.msk [vmem:[#allocation2 + $0x60] sm:$0xff] %vm1053, %v1030
      %1067 = vst.msk [vmem:[#allocation2 + $0x68] sm:$0xff] %vm1053, %v1032
      %1068 = vst.msk [vmem:[#allocation2 + $0x70] sm:$0xff] %vm1053, %v1034
      %1069 = vst.msk [vmem:[#allocation2 + $0x78] sm:$0xff] %vm1053, %v1036
      %s1070 = sadd.s32 %s197, 1
      %s1071 = smul.u32 %s1070, 3
      %s1072 = smul.addr %s1071, 4
      %s1073 = scalar_lea.vmem %s184, %s1072
      %v1074 = vld [vmem:[%s1073] sm:$0xf]
      %v1075 = vld [vmem:[%s1073 + $0x4] sm:$0xf]
      %v1076 = vld [vmem:[%s1073 + $0xc] sm:$0xf]
      %v1077 = vld [vmem:[%s1073 + $0x10] sm:$0xf]
      %v1078 = vld [vmem:[%s1073 + $0x18] sm:$0xf]
      %v1079 = vld [vmem:[%s1073 + $0x1c] sm:$0xf]
      %v1080 = vld [vmem:[%s1073 + $0x24] sm:$0xf]
      %v1081 = vld [vmem:[%s1073 + $0x28] sm:$0xf]
      %v1082 = vld [vmem:[%s1073 + $0x30] sm:$0xf]
      %v1083 = vld [vmem:[%s1073 + $0x34] sm:$0xf]
      %v1084 = vld [vmem:[%s1073 + $0x3c] sm:$0xf]
      %v1085 = vld [vmem:[%s1073 + $0x40] sm:$0xf]
      %v1086 = vld [vmem:[%s1073 + $0x48] sm:$0xf]
      %v1087 = vld [vmem:[%s1073 + $0x4c] sm:$0xf]
      %v1088 = vld [vmem:[%s1073 + $0x54] sm:$0xf]
      %v1089 = vld [vmem:[%s1073 + $0x58] sm:$0xf]
      %v1090 = vld [vmem:[%s1073 + $0x60] sm:$0xf]
      %v1091 = vld [vmem:[%s1073 + $0x64] sm:$0xf]
      %v1092 = vld [vmem:[%s1073 + $0x6c] sm:$0xf]
      %v1093 = vld [vmem:[%s1073 + $0x70] sm:$0xf]
      %v1094 = vld [vmem:[%s1073 + $0x78] sm:$0xf]
      %v1095 = vld [vmem:[%s1073 + $0x7c] sm:$0xf]
      %v1096 = vld [vmem:[%s1073 + $0x84] sm:$0xf]
      %v1097 = vld [vmem:[%s1073 + $0x88] sm:$0xf]
      %v1098 = vld [vmem:[%s1073 + $0x90] sm:$0xf]
      %v1099 = vld [vmem:[%s1073 + $0x94] sm:$0xf]
      %v1100 = vld [vmem:[%s1073 + $0x9c] sm:$0xf]
      %v1101 = vld [vmem:[%s1073 + $0xa0] sm:$0xf]
      %v1102 = vld [vmem:[%s1073 + $0xa8] sm:$0xf]
      %v1103 = vld [vmem:[%s1073 + $0xac] sm:$0xf]
      %v1104 = vld [vmem:[%s1073 + $0xb4] sm:$0xf]
      %v1105 = vld [vmem:[%s1073 + $0xb8] sm:$0xf]
      %v1138 = vunpack.c.l.b16 %v1074
      %v1139 = vunpack.c.l.b16 %v1075
      %v1140 = vunpack.c.l.b16 %v1076
      %v1141 = vunpack.c.l.b16 %v1077
      %v1142 = vunpack.c.l.b16 %v1078
      %v1143 = vunpack.c.l.b16 %v1079
      %v1144 = vunpack.c.l.b16 %v1080
      %v1145 = vunpack.c.l.b16 %v1081
      %v1146 = vunpack.c.l.b16 %v1082
      %v1147 = vunpack.c.l.b16 %v1083
      %v1148 = vunpack.c.l.b16 %v1084
      %v1149 = vunpack.c.l.b16 %v1085
      %v1150 = vunpack.c.l.b16 %v1086
      %v1151 = vunpack.c.l.b16 %v1087
      %v1152 = vunpack.c.l.b16 %v1088
      %v1153 = vunpack.c.l.b16 %v1089
      %v1154 = vunpack.c.l.b16 %v1090
      %v1155 = vunpack.c.l.b16 %v1091
      %v1156 = vunpack.c.l.b16 %v1092
      %v1157 = vunpack.c.l.b16 %v1093
      %v1158 = vunpack.c.l.b16 %v1094
      %v1159 = vunpack.c.l.b16 %v1095
      %v1160 = vunpack.c.l.b16 %v1096
      %v1161 = vunpack.c.l.b16 %v1097
      %v1162 = vunpack.c.l.b16 %v1098
      %v1163 = vunpack.c.l.b16 %v1099
      %v1164 = vunpack.c.l.b16 %v1100
      %v1165 = vunpack.c.l.b16 %v1101
      %v1166 = vunpack.c.l.b16 %v1102
      %v1167 = vunpack.c.l.b16 %v1103
      %v1168 = vunpack.c.l.b16 %v1104
      %v1169 = vunpack.c.l.b16 %v1105
      %v1170 = vpack.c.b16 %v1139, %v1138
      %v1171 = vpack.c.b16 %v1141, %v1140
      %v1172 = vpack.c.b16 %v1143, %v1142
      %v1173 = vpack.c.b16 %v1145, %v1144
      %v1174 = vpack.c.b16 %v1147, %v1146
      %v1175 = vpack.c.b16 %v1149, %v1148
      %v1176 = vpack.c.b16 %v1151, %v1150
      %v1177 = vpack.c.b16 %v1153, %v1152
      %v1178 = vpack.c.b16 %v1155, %v1154
      %v1179 = vpack.c.b16 %v1157, %v1156
      %v1180 = vpack.c.b16 %v1159, %v1158
      %v1181 = vpack.c.b16 %v1161, %v1160
      %v1182 = vpack.c.b16 %v1163, %v1162
      %v1183 = vpack.c.b16 %v1165, %v1164
      %v1184 = vpack.c.b16 %v1167, %v1166
      %v1185 = vpack.c.b16 %v1169, %v1168
      %1186 = vrot.lane.b32.xlu0 %v1170, 12
      %v1187 = vpop.permute.xlu0 %1186
      %1188 = vrot.lane.b32.xlu0 %v1171, 12
      %v1189 = vpop.permute.xlu0 %1188
      %1190 = vrot.lane.b32.xlu0 %v1172, 12
      %v1191 = vpop.permute.xlu0 %1190
      %1192 = vrot.lane.b32.xlu0 %v1173, 12
      %v1193 = vpop.permute.xlu0 %1192
      %1194 = vrot.lane.b32.xlu0 %v1174, 12
      %v1195 = vpop.permute.xlu0 %1194
      %1196 = vrot.lane.b32.xlu0 %v1175, 12
      %v1197 = vpop.permute.xlu0 %1196
      %1198 = vrot.lane.b32.xlu0 %v1176, 12
      %v1199 = vpop.permute.xlu0 %1198
      %1200 = vrot.lane.b32.xlu0 %v1177, 12
      %v1201 = vpop.permute.xlu0 %1200
      %1202 = vrot.lane.b32.xlu0 %v1178, 12
      %v1203 = vpop.permute.xlu0 %1202
      %1204 = vrot.lane.b32.xlu0 %v1179, 12
      %v1205 = vpop.permute.xlu0 %1204
      %1206 = vrot.lane.b32.xlu0 %v1180, 12
      %v1207 = vpop.permute.xlu0 %1206
      %1208 = vrot.lane.b32.xlu0 %v1181, 12
      %v1209 = vpop.permute.xlu0 %1208
      %1210 = vrot.lane.b32.xlu0 %v1182, 12
      %v1211 = vpop.permute.xlu0 %1210
      %1212 = vrot.lane.b32.xlu0 %v1183, 12
      %v1213 = vpop.permute.xlu0 %1212
      %1214 = vrot.lane.b32.xlu0 %v1184, 12
      %v1215 = vpop.permute.xlu0 %1214
      %1216 = vrot.lane.b32.xlu0 %v1185, 12
      %v1217 = vpop.permute.xlu0 %1216
      %vm1234 = vcmask 130144
      %1235 = vst.msk [vmem:[#allocation2] sm:$0xff] %vm1234, %v1187
      %1236 = vst.msk [vmem:[#allocation2 + $0x8] sm:$0xff] %vm1234, %v1189
      %1237 = vst.msk [vmem:[#allocation2 + $0x10] sm:$0xff] %vm1234, %v1191
      %1238 = vst.msk [vmem:[#allocation2 + $0x18] sm:$0xff] %vm1234, %v1193
      %1239 = vst.msk [vmem:[#allocation2 + $0x20] sm:$0xff] %vm1234, %v1195
      %1240 = vst.msk [vmem:[#allocation2 + $0x28] sm:$0xff] %vm1234, %v1197
      %1241 = vst.msk [vmem:[#allocation2 + $0x30] sm:$0xff] %vm1234, %v1199
      %1242 = vst.msk [vmem:[#allocation2 + $0x38] sm:$0xff] %vm1234, %v1201
      %1243 = vst.msk [vmem:[#allocation2 + $0x40] sm:$0xff] %vm1234, %v1203
      %1244 = vst.msk [vmem:[#allocation2 + $0x48] sm:$0xff] %vm1234, %v1205
      %1245 = vst.msk [vmem:[#allocation2 + $0x50] sm:$0xff] %vm1234, %v1207
      %1246 = vst.msk [vmem:[#allocation2 + $0x58] sm:$0xff] %vm1234, %v1209
      %1247 = vst.msk [vmem:[#allocation2 + $0x60] sm:$0xff] %vm1234, %v1211
      %1248 = vst.msk [vmem:[#allocation2 + $0x68] sm:$0xff] %vm1234, %v1213
      %1249 = vst.msk [vmem:[#allocation2 + $0x70] sm:$0xff] %vm1234, %v1215
      %1250 = vst.msk [vmem:[#allocation2 + $0x78] sm:$0xff] %vm1234, %v1217
      %v1251 = vld [vmem:[%s1073] sm:$0xf]
      %v1252 = vld [vmem:[%s1073 + $0x4] sm:$0xf]
      %v1253 = vld [vmem:[%s1073 + $0x8] sm:$0x1]
      %v1254 = vld [vmem:[%s1073 + $0xc] sm:$0xf]
      %v1255 = vld [vmem:[%s1073 + $0x10] sm:$0xf]
      %v1256 = vld [vmem:[%s1073 + $0x14] sm:$0x1]
      %v1257 = vld [vmem:[%s1073 + $0x18] sm:$0xf]
      %v1258 = vld [vmem:[%s1073 + $0x1c] sm:$0xf]
      %v1259 = vld [vmem:[%s1073 + $0x20] sm:$0x1]
      %v1260 = vld [vmem:[%s1073 + $0x24] sm:$0xf]
      %v1261 = vld [vmem:[%s1073 + $0x28] sm:$0xf]
      %v1262 = vld [vmem:[%s1073 + $0x2c] sm:$0x1]
      %v1263 = vld [vmem:[%s1073 + $0x30] sm:$0xf]
      %v1264 = vld [vmem:[%s1073 + $0x34] sm:$0xf]
      %v1265 = vld [vmem:[%s1073 + $0x38] sm:$0x1]
      %v1266 = vld [vmem:[%s1073 + $0x3c] sm:$0xf]
      %v1267 = vld [vmem:[%s1073 + $0x40] sm:$0xf]
      %v1268 = vld [vmem:[%s1073 + $0x44] sm:$0x1]
      %v1269 = vld [vmem:[%s1073 + $0x48] sm:$0xf]
      %v1270 = vld [vmem:[%s1073 + $0x4c] sm:$0xf]
      %v1271 = vld [vmem:[%s1073 + $0x50] sm:$0x1]
      %v1272 = vld [vmem:[%s1073 + $0x54] sm:$0xf]
      %v1273 = vld [vmem:[%s1073 + $0x58] sm:$0xf]
      %v1274 = vld [vmem:[%s1073 + $0x5c] sm:$0x1]
      %v1275 = vld [vmem:[%s1073 + $0x60] sm:$0xf]
      %v1276 = vld [vmem:[%s1073 + $0x64] sm:$0xf]
      %v1277 = vld [vmem:[%s1073 + $0x68] sm:$0x1]
      %v1278 = vld [vmem:[%s1073 + $0x6c] sm:$0xf]
      %v1279 = vld [vmem:[%s1073 + $0x70] sm:$0xf]
      %v1280 = vld [vmem:[%s1073 + $0x74] sm:$0x1]
      %v1281 = vld [vmem:[%s1073 + $0x78] sm:$0xf]
      %v1282 = vld [vmem:[%s1073 + $0x7c] sm:$0xf]
      %v1283 = vld [vmem:[%s1073 + $0x80] sm:$0x1]
      %v1284 = vld [vmem:[%s1073 + $0x84] sm:$0xf]
      %v1285 = vld [vmem:[%s1073 + $0x88] sm:$0xf]
      %v1286 = vld [vmem:[%s1073 + $0x8c] sm:$0x1]
      %v1287 = vld [vmem:[%s1073 + $0x90] sm:$0xf]
      %v1288 = vld [vmem:[%s1073 + $0x94] sm:$0xf]
      %v1289 = vld [vmem:[%s1073 + $0x98] sm:$0x1]
      %v1290 = vld [vmem:[%s1073 + $0x9c] sm:$0xf]
      %v1291 = vld [vmem:[%s1073 + $0xa0] sm:$0xf]
      %v1292 = vld [vmem:[%s1073 + $0xa4] sm:$0x1]
      %v1293 = vld [vmem:[%s1073 + $0xa8] sm:$0xf]
      %v1294 = vld [vmem:[%s1073 + $0xac] sm:$0xf]
      %v1295 = vld [vmem:[%s1073 + $0xb0] sm:$0x1]
      %v1296 = vld [vmem:[%s1073 + $0xb4] sm:$0xf]
      %v1297 = vld [vmem:[%s1073 + $0xb8] sm:$0xf]
      %v1298 = vld [vmem:[%s1073 + $0xbc] sm:$0x1]
      %v1347 = vunpack.c.l.b16 %v1251
      %v1348 = vunpack.c.l.b16 %v1252
      %v1349 = vunpack.c.l.b16 %v1253
      %v1350 = vunpack.c.l.b16 %v1254
      %v1351 = vunpack.c.l.b16 %v1255
      %v1352 = vunpack.c.l.b16 %v1256
      %v1353 = vunpack.c.l.b16 %v1257
      %v1354 = vunpack.c.l.b16 %v1258
      %v1355 = vunpack.c.l.b16 %v1259
      %v1356 = vunpack.c.l.b16 %v1260
      %v1357 = vunpack.c.l.b16 %v1261
      %v1358 = vunpack.c.l.b16 %v1262
      %v1359 = vunpack.c.l.b16 %v1263
      %v1360 = vunpack.c.l.b16 %v1264
      %v1361 = vunpack.c.l.b16 %v1265
      %v1362 = vunpack.c.l.b16 %v1266
      %v1363 = vunpack.c.l.b16 %v1267
      %v1364 = vunpack.c.l.b16 %v1268
      %v1365 = vunpack.c.l.b16 %v1269
      %v1366 = vunpack.c.l.b16 %v1270
      %v1367 = vunpack.c.l.b16 %v1271
      %v1368 = vunpack.c.l.b16 %v1272
      %v1369 = vunpack.c.l.b16 %v1273
      %v1370 = vunpack.c.l.b16 %v1274
      %v1371 = vunpack.c.l.b16 %v1275
      %v1372 = vunpack.c.l.b16 %v1276
      %v1373 = vunpack.c.l.b16 %v1277
      %v1374 = vunpack.c.l.b16 %v1278
      %v1375 = vunpack.c.l.b16 %v1279
      %v1376 = vunpack.c.l.b16 %v1280
      %v1377 = vunpack.c.l.b16 %v1281
      %v1378 = vunpack.c.l.b16 %v1282
      %v1379 = vunpack.c.l.b16 %v1283
      %v1380 = vunpack.c.l.b16 %v1284
      %v1381 = vunpack.c.l.b16 %v1285
      %v1382 = vunpack.c.l.b16 %v1286
      %v1383 = vunpack.c.l.b16 %v1287
      %v1384 = vunpack.c.l.b16 %v1288
      %v1385 = vunpack.c.l.b16 %v1289
      %v1386 = vunpack.c.l.b16 %v1290
      %v1387 = vunpack.c.l.b16 %v1291
      %v1388 = vunpack.c.l.b16 %v1292
      %v1389 = vunpack.c.l.b16 %v1293
      %v1390 = vunpack.c.l.b16 %v1294
      %v1391 = vunpack.c.l.b16 %v1295
      %v1392 = vunpack.c.l.b16 %v1296
      %v1393 = vunpack.c.l.b16 %v1297
      %v1394 = vunpack.c.l.b16 %v1298
      %v1395 = vpack.c.b16 %v1348, %v1347
      %v1396 = vpack.c.b16 %v1349, %v1349
      %v1397 = vpack.c.b16 %v1351, %v1350
      %v1398 = vpack.c.b16 %v1352, %v1352
      %v1399 = vpack.c.b16 %v1354, %v1353
      %v1400 = vpack.c.b16 %v1355, %v1355
      %v1401 = vpack.c.b16 %v1357, %v1356
      %v1402 = vpack.c.b16 %v1358, %v1358
      %v1403 = vpack.c.b16 %v1360, %v1359
      %v1404 = vpack.c.b16 %v1361, %v1361
      %v1405 = vpack.c.b16 %v1363, %v1362
      %v1406 = vpack.c.b16 %v1364, %v1364
      %v1407 = vpack.c.b16 %v1366, %v1365
      %v1408 = vpack.c.b16 %v1367, %v1367
      %v1409 = vpack.c.b16 %v1369, %v1368
      %v1410 = vpack.c.b16 %v1370, %v1370
      %v1411 = vpack.c.b16 %v1372, %v1371
      %v1412 = vpack.c.b16 %v1373, %v1373
      %v1413 = vpack.c.b16 %v1375, %v1374
      %v1414 = vpack.c.b16 %v1376, %v1376
      %v1415 = vpack.c.b16 %v1378, %v1377
      %v1416 = vpack.c.b16 %v1379, %v1379
      %v1417 = vpack.c.b16 %v1381, %v1380
      %v1418 = vpack.c.b16 %v1382, %v1382
      %v1419 = vpack.c.b16 %v1384, %v1383
      %v1420 = vpack.c.b16 %v1385, %v1385
      %v1421 = vpack.c.b16 %v1387, %v1386
      %v1422 = vpack.c.b16 %v1388, %v1388
      %v1423 = vpack.c.b16 %v1390, %v1389
      %v1424 = vpack.c.b16 %v1391, %v1391
      %v1425 = vpack.c.b16 %v1393, %v1392
      %v1426 = vpack.c.b16 %v1394, %v1394
      %v1428 = vshrl.u32 %v1395, 16
      %v1430 = vshll.u32 %v1395, 16
      %v1432 = vrot.slane %v1430, 1
      %v1433 = vor.u32 %v1428, %v1432
      %v1435 = vshll.u32 %v1396, 16
      %v1437 = vrot.slane %v1435, 1
      %v1438 = vsel %vm522, %v1433, %v1437
      %v1440 = vshrl.u32 %v1397, 16
      %v1442 = vshll.u32 %v1397, 16
      %v1444 = vrot.slane %v1442, 1
      %v1445 = vor.u32 %v1440, %v1444
      %v1447 = vshll.u32 %v1398, 16
      %v1449 = vrot.slane %v1447, 1
      %v1450 = vsel %vm522, %v1445, %v1449
      %v1452 = vshrl.u32 %v1399, 16
      %v1454 = vshll.u32 %v1399, 16
      %v1456 = vrot.slane %v1454, 1
      %v1457 = vor.u32 %v1452, %v1456
      %v1459 = vshll.u32 %v1400, 16
      %v1461 = vrot.slane %v1459, 1
      %v1462 = vsel %vm522, %v1457, %v1461
      %v1464 = vshrl.u32 %v1401, 16
      %v1466 = vshll.u32 %v1401, 16
      %v1468 = vrot.slane %v1466, 1
      %v1469 = vor.u32 %v1464, %v1468
      %v1471 = vshll.u32 %v1402, 16
      %v1473 = vrot.slane %v1471, 1
      %v1474 = vsel %vm522, %v1469, %v1473
      %v1476 = vshrl.u32 %v1403, 16
      %v1478 = vshll.u32 %v1403, 16
      %v1480 = vrot.slane %v1478, 1
      %v1481 = vor.u32 %v1476, %v1480
      %v1483 = vshll.u32 %v1404, 16
      %v1485 = vrot.slane %v1483, 1
      %v1486 = vsel %vm522, %v1481, %v1485
      %v1488 = vshrl.u32 %v1405, 16
      %v1490 = vshll.u32 %v1405, 16
      %v1492 = vrot.slane %v1490, 1
      %v1493 = vor.u32 %v1488, %v1492
      %v1495 = vshll.u32 %v1406, 16
      %v1497 = vrot.slane %v1495, 1
      %v1498 = vsel %vm522, %v1493, %v1497
      %v1500 = vshrl.u32 %v1407, 16
      %v1502 = vshll.u32 %v1407, 16
      %v1504 = vrot.slane %v1502, 1
      %v1505 = vor.u32 %v1500, %v1504
      %v1507 = vshll.u32 %v1408, 16
      %v1509 = vrot.slane %v1507, 1
      %v1510 = vsel %vm522, %v1505, %v1509
      %v1512 = vshrl.u32 %v1409, 16
      %v1514 = vshll.u32 %v1409, 16
      %v1516 = vrot.slane %v1514, 1
      %v1517 = vor.u32 %v1512, %v1516
      %v1519 = vshll.u32 %v1410, 16
      %v1521 = vrot.slane %v1519, 1
      %v1522 = vsel %vm522, %v1517, %v1521
      %v1524 = vshrl.u32 %v1411, 16
      %v1526 = vshll.u32 %v1411, 16
      %v1528 = vrot.slane %v1526, 1
      %v1529 = vor.u32 %v1524, %v1528
      %v1531 = vshll.u32 %v1412, 16
      %v1533 = vrot.slane %v1531, 1
      %v1534 = vsel %vm522, %v1529, %v1533
      %v1536 = vshrl.u32 %v1413, 16
      %v1538 = vshll.u32 %v1413, 16
      %v1540 = vrot.slane %v1538, 1
      %v1541 = vor.u32 %v1536, %v1540
      %v1543 = vshll.u32 %v1414, 16
      %v1545 = vrot.slane %v1543, 1
      %v1546 = vsel %vm522, %v1541, %v1545
      %v1548 = vshrl.u32 %v1415, 16
      %v1550 = vshll.u32 %v1415, 16
      %v1552 = vrot.slane %v1550, 1
      %v1553 = vor.u32 %v1548, %v1552
      %v1555 = vshll.u32 %v1416, 16
      %v1557 = vrot.slane %v1555, 1
      %v1558 = vsel %vm522, %v1553, %v1557
      %v1560 = vshrl.u32 %v1417, 16
      %v1562 = vshll.u32 %v1417, 16
      %v1564 = vrot.slane %v1562, 1
      %v1565 = vor.u32 %v1560, %v1564
      %v1567 = vshll.u32 %v1418, 16
      %v1569 = vrot.slane %v1567, 1
      %v1570 = vsel %vm522, %v1565, %v1569
      %v1572 = vshrl.u32 %v1419, 16
      %v1574 = vshll.u32 %v1419, 16
      %v1576 = vrot.slane %v1574, 1
      %v1577 = vor.u32 %v1572, %v1576
      %v1579 = vshll.u32 %v1420, 16
      %v1581 = vrot.slane %v1579, 1
      %v1582 = vsel %vm522, %v1577, %v1581
      %v1584 = vshrl.u32 %v1421, 16
      %v1586 = vshll.u32 %v1421, 16
      %v1588 = vrot.slane %v1586, 1
      %v1589 = vor.u32 %v1584, %v1588
      %v1591 = vshll.u32 %v1422, 16
      %v1593 = vrot.slane %v1591, 1
      %v1594 = vsel %vm522, %v1589, %v1593
      %v1596 = vshrl.u32 %v1423, 16
      %v1598 = vshll.u32 %v1423, 16
      %v1600 = vrot.slane %v1598, 1
      %v1601 = vor.u32 %v1596, %v1600
      %v1603 = vshll.u32 %v1424, 16
      %v1605 = vrot.slane %v1603, 1
      %v1606 = vsel %vm522, %v1601, %v1605
      %v1608 = vshrl.u32 %v1425, 16
      %v1610 = vshll.u32 %v1425, 16
      %v1612 = vrot.slane %v1610, 1
      %v1613 = vor.u32 %v1608, %v1612
      %v1615 = vshll.u32 %v1426, 16
      %v1617 = vrot.slane %v1615, 1
      %v1618 = vsel %vm522, %v1613, %v1617
      %1619 = vrot.lane.b32.xlu0 %v1438, 16
      %v1620 = vpop.permute.xlu0 %1619
      %1621 = vrot.lane.b32.xlu0 %v1450, 16
      %v1622 = vpop.permute.xlu0 %1621
      %1623 = vrot.lane.b32.xlu0 %v1462, 16
      %v1624 = vpop.permute.xlu0 %1623
      %1625 = vrot.lane.b32.xlu0 %v1474, 16
      %v1626 = vpop.permute.xlu0 %1625
      %1627 = vrot.lane.b32.xlu0 %v1486, 16
      %v1628 = vpop.permute.xlu0 %1627
      %1629 = vrot.lane.b32.xlu0 %v1498, 16
      %v1630 = vpop.permute.xlu0 %1629
      %1631 = vrot.lane.b32.xlu0 %v1510, 16
      %v1632 = vpop.permute.xlu0 %1631
      %1633 = vrot.lane.b32.xlu0 %v1522, 16
      %v1634 = vpop.permute.xlu0 %1633
      %1635 = vrot.lane.b32.xlu0 %v1534, 16
      %v1636 = vpop.permute.xlu0 %1635
      %1637 = vrot.lane.b32.xlu0 %v1546, 16
      %v1638 = vpop.permute.xlu0 %1637
      %1639 = vrot.lane.b32.xlu0 %v1558, 16
      %v1640 = vpop.permute.xlu0 %1639
      %1641 = vrot.lane.b32.xlu0 %v1570, 16
      %v1642 = vpop.permute.xlu0 %1641
      %1643 = vrot.lane.b32.xlu0 %v1582, 16
      %v1644 = vpop.permute.xlu0 %1643
      %1645 = vrot.lane.b32.xlu0 %v1594, 16
      %v1646 = vpop.permute.xlu0 %1645
      %1647 = vrot.lane.b32.xlu0 %v1606, 16
      %v1648 = vpop.permute.xlu0 %1647
      %1649 = vrot.lane.b32.xlu0 %v1618, 16
      %v1650 = vpop.permute.xlu0 %1649
      %vm1667 = vcmask 162944
      %1668 = vst.msk [vmem:[#allocation2] sm:$0xff] %vm1667, %v1620
      %1669 = vst.msk [vmem:[#allocation2 + $0x8] sm:$0xff] %vm1667, %v1622
      %1670 = vst.msk [vmem:[#allocation2 + $0x10] sm:$0xff] %vm1667, %v1624
      %1671 = vst.msk [vmem:[#allocation2 + $0x18] sm:$0xff] %vm1667, %v1626
      %1672 = vst.msk [vmem:[#allocation2 + $0x20] sm:$0xff] %vm1667, %v1628
      %1673 = vst.msk [vmem:[#allocation2 + $0x28] sm:$0xff] %vm1667, %v1630
      %1674 = vst.msk [vmem:[#allocation2 + $0x30] sm:$0xff] %vm1667, %v1632
      %1675 = vst.msk [vmem:[#allocation2 + $0x38] sm:$0xff] %vm1667, %v1634
      %1676 = vst.msk [vmem:[#allocation2 + $0x40] sm:$0xff] %vm1667, %v1636
      %1677 = vst.msk [vmem:[#allocation2 + $0x48] sm:$0xff] %vm1667, %v1638
      %1678 = vst.msk [vmem:[#allocation2 + $0x50] sm:$0xff] %vm1667, %v1640
      %1679 = vst.msk [vmem:[#allocation2 + $0x58] sm:$0xff] %vm1667, %v1642
      %1680 = vst.msk [vmem:[#allocation2 + $0x60] sm:$0xff] %vm1667, %v1644
      %1681 = vst.msk [vmem:[#allocation2 + $0x68] sm:$0xff] %vm1667, %v1646
      %1682 = vst.msk [vmem:[#allocation2 + $0x70] sm:$0xff] %vm1667, %v1648
      %1683 = vst.msk [vmem:[#allocation2 + $0x78] sm:$0xff] %vm1667, %v1650
      %v1684 = vld [vmem:[%s1073] sm:$0xe]
      %v1685 = vld [vmem:[%s1073 + $0x4] sm:$0xf]
      %v1686 = vld [vmem:[%s1073 + $0x8] sm:$0x1]
      %v1687 = vld [vmem:[%s1073 + $0xc] sm:$0xe]
      %v1688 = vld [vmem:[%s1073 + $0x10] sm:$0xf]
      %v1689 = vld [vmem:[%s1073 + $0x14] sm:$0x1]
      %v1690 = vld [vmem:[%s1073 + $0x18] sm:$0xe]
      %v1691 = vld [vmem:[%s1073 + $0x1c] sm:$0xf]
      %v1692 = vld [vmem:[%s1073 + $0x20] sm:$0x1]
      %v1693 = vld [vmem:[%s1073 + $0x24] sm:$0xe]
      %v1694 = vld [vmem:[%s1073 + $0x28] sm:$0xf]
      %v1695 = vld [vmem:[%s1073 + $0x2c] sm:$0x1]
      %v1696 = vld [vmem:[%s1073 + $0x30] sm:$0xe]
      %v1697 = vld [vmem:[%s1073 + $0x34] sm:$0xf]
      %v1698 = vld [vmem:[%s1073 + $0x38] sm:$0x1]
      %v1699 = vld [vmem:[%s1073 + $0x3c] sm:$0xe]
      %v1700 = vld [vmem:[%s1073 + $0x40] sm:$0xf]
      %v1701 = vld [vmem:[%s1073 + $0x44] sm:$0x1]
      %v1702 = vld [vmem:[%s1073 + $0x48] sm:$0xe]
      %v1703 = vld [vmem:[%s1073 + $0x4c] sm:$0xf]
      %v1704 = vld [vmem:[%s1073 + $0x50] sm:$0x1]
      %v1705 = vld [vmem:[%s1073 + $0x54] sm:$0xe]
      %v1706 = vld [vmem:[%s1073 + $0x58] sm:$0xf]
      %v1707 = vld [vmem:[%s1073 + $0x5c] sm:$0x1]
      %v1708 = vld [vmem:[%s1073 + $0x60] sm:$0xe]
      %v1709 = vld [vmem:[%s1073 + $0x64] sm:$0xf]
      %v1710 = vld [vmem:[%s1073 + $0x68] sm:$0x1]
      %v1711 = vld [vmem:[%s1073 + $0x6c] sm:$0xe]
      %v1712 = vld [vmem:[%s1073 + $0x70] sm:$0xf]
      %v1713 = vld [vmem:[%s1073 + $0x74] sm:$0x1]
      %v1714 = vld [vmem:[%s1073 + $0x78] sm:$0xe]
      %v1715 = vld [vmem:[%s1073 + $0x7c] sm:$0xf]
      %v1716 = vld [vmem:[%s1073 + $0x80] sm:$0x1]
      %v1717 = vld [vmem:[%s1073 + $0x84] sm:$0xe]
      %v1718 = vld [vmem:[%s1073 + $0x88] sm:$0xf]
      %v1719 = vld [vmem:[%s1073 + $0x8c] sm:$0x1]
      %v1720 = vld [vmem:[%s1073 + $0x90] sm:$0xe]
      %v1721 = vld [vmem:[%s1073 + $0x94] sm:$0xf]
      %v1722 = vld [vmem:[%s1073 + $0x98] sm:$0x1]
      %v1723 = vld [vmem:[%s1073 + $0x9c] sm:$0xe]
      %v1724 = vld [vmem:[%s1073 + $0xa0] sm:$0xf]
      %v1725 = vld [vmem:[%s1073 + $0xa4] sm:$0x1]
      %v1726 = vld [vmem:[%s1073 + $0xa8] sm:$0xe]
      %v1727 = vld [vmem:[%s1073 + $0xac] sm:$0xf]
      %v1728 = vld [vmem:[%s1073 + $0xb0] sm:$0x1]
      %v1729 = vld [vmem:[%s1073 + $0xb4] sm:$0xe]
      %v1730 = vld [vmem:[%s1073 + $0xb8] sm:$0xf]
      %v1731 = vld [vmem:[%s1073 + $0xbc] sm:$0x1]
      %v1780 = vunpack.c.l.b16 %v1684
      %v1781 = vunpack.c.l.b16 %v1685
      %v1782 = vunpack.c.l.b16 %v1686
      %v1783 = vunpack.c.l.b16 %v1687
      %v1784 = vunpack.c.l.b16 %v1688
      %v1785 = vunpack.c.l.b16 %v1689
      %v1786 = vunpack.c.l.b16 %v1690
      %v1787 = vunpack.c.l.b16 %v1691
      %v1788 = vunpack.c.l.b16 %v1692
      %v1789 = vunpack.c.l.b16 %v1693
      %v1790 = vunpack.c.l.b16 %v1694
      %v1791 = vunpack.c.l.b16 %v1695
      %v1792 = vunpack.c.l.b16 %v1696
      %v1793 = vunpack.c.l.b16 %v1697
      %v1794 = vunpack.c.l.b16 %v1698
      %v1795 = vunpack.c.l.b16 %v1699
      %v1796 = vunpack.c.l.b16 %v1700
      %v1797 = vunpack.c.l.b16 %v1701
      %v1798 = vunpack.c.l.b16 %v1702
      %v1799 = vunpack.c.l.b16 %v1703
      %v1800 = vunpack.c.l.b16 %v1704
      %v1801 = vunpack.c.l.b16 %v1705
      %v1802 = vunpack.c.l.b16 %v1706
      %v1803 = vunpack.c.l.b16 %v1707
      %v1804 = vunpack.c.l.b16 %v1708
      %v1805 = vunpack.c.l.b16 %v1709
      %v1806 = vunpack.c.l.b16 %v1710
      %v1807 = vunpack.c.l.b16 %v1711
      %v1808 = vunpack.c.l.b16 %v1712
      %v1809 = vunpack.c.l.b16 %v1713
      %v1810 = vunpack.c.l.b16 %v1714
      %v1811 = vunpack.c.l.b16 %v1715
      %v1812 = vunpack.c.l.b16 %v1716
      %v1813 = vunpack.c.l.b16 %v1717
      %v1814 = vunpack.c.l.b16 %v1718
      %v1815 = vunpack.c.l.b16 %v1719
      %v1816 = vunpack.c.l.b16 %v1720
      %v1817 = vunpack.c.l.b16 %v1721
      %v1818 = vunpack.c.l.b16 %v1722
      %v1819 = vunpack.c.l.b16 %v1723
      %v1820 = vunpack.c.l.b16 %v1724
      %v1821 = vunpack.c.l.b16 %v1725
      %v1822 = vunpack.c.l.b16 %v1726
      %v1823 = vunpack.c.l.b16 %v1727
      %v1824 = vunpack.c.l.b16 %v1728
      %v1825 = vunpack.c.l.b16 %v1729
      %v1826 = vunpack.c.l.b16 %v1730
      %v1827 = vunpack.c.l.b16 %v1731
      %v1828 = vpack.c.b16 %v1781, %v1780
      %v1829 = vpack.c.b16 %v1782, %v1782
      %v1830 = vpack.c.b16 %v1784, %v1783
      %v1831 = vpack.c.b16 %v1785, %v1785
      %v1832 = vpack.c.b16 %v1787, %v1786
      %v1833 = vpack.c.b16 %v1788, %v1788
      %v1834 = vpack.c.b16 %v1790, %v1789
      %v1835 = vpack.c.b16 %v1791, %v1791
      %v1836 = vpack.c.b16 %v1793, %v1792
      %v1837 = vpack.c.b16 %v1794, %v1794
      %v1838 = vpack.c.b16 %v1796, %v1795
      %v1839 = vpack.c.b16 %v1797, %v1797
      %v1840 = vpack.c.b16 %v1799, %v1798
      %v1841 = vpack.c.b16 %v1800, %v1800
      %v1842 = vpack.c.b16 %v1802, %v1801
      %v1843 = vpack.c.b16 %v1803, %v1803
      %v1844 = vpack.c.b16 %v1805, %v1804
      %v1845 = vpack.c.b16 %v1806, %v1806
      %v1846 = vpack.c.b16 %v1808, %v1807
      %v1847 = vpack.c.b16 %v1809, %v1809
      %v1848 = vpack.c.b16 %v1811, %v1810
      %v1849 = vpack.c.b16 %v1812, %v1812
      %v1850 = vpack.c.b16 %v1814, %v1813
      %v1851 = vpack.c.b16 %v1815, %v1815
      %v1852 = vpack.c.b16 %v1817, %v1816
      %v1853 = vpack.c.b16 %v1818, %v1818
      %v1854 = vpack.c.b16 %v1820, %v1819
      %v1855 = vpack.c.b16 %v1821, %v1821
      %v1856 = vpack.c.b16 %v1823, %v1822
      %v1857 = vpack.c.b16 %v1824, %v1824
      %v1858 = vpack.c.b16 %v1826, %v1825
      %v1859 = vpack.c.b16 %v1827, %v1827
      %v1860 = vrot.slane %v1828, 1
      %v1861 = vrot.slane %v1829, 1
      %v1862 = vsel %vm956, %v1860, %v1861
      %v1863 = vrot.slane %v1830, 1
      %v1864 = vrot.slane %v1831, 1
      %v1865 = vsel %vm956, %v1863, %v1864
      %v1866 = vrot.slane %v1832, 1
      %v1867 = vrot.slane %v1833, 1
      %v1868 = vsel %vm956, %v1866, %v1867
      %v1869 = vrot.slane %v1834, 1
      %v1870 = vrot.slane %v1835, 1
      %v1871 = vsel %vm956, %v1869, %v1870
      %v1872 = vrot.slane %v1836, 1
      %v1873 = vrot.slane %v1837, 1
      %v1874 = vsel %vm956, %v1872, %v1873
      %v1875 = vrot.slane %v1838, 1
      %v1876 = vrot.slane %v1839, 1
      %v1877 = vsel %vm956, %v1875, %v1876
      %v1878 = vrot.slane %v1840, 1
      %v1879 = vrot.slane %v1841, 1
      %v1880 = vsel %vm956, %v1878, %v1879
      %v1881 = vrot.slane %v1842, 1
      %v1882 = vrot.slane %v1843, 1
      %v1883 = vsel %vm956, %v1881, %v1882
      %v1884 = vrot.slane %v1844, 1
      %v1885 = vrot.slane %v1845, 1
      %v1886 = vsel %vm956, %v1884, %v1885
      %v1887 = vrot.slane %v1846, 1
      %v1888 = vrot.slane %v1847, 1
      %v1889 = vsel %vm956, %v1887, %v1888
      %v1890 = vrot.slane %v1848, 1
      %v1891 = vrot.slane %v1849, 1
      %v1892 = vsel %vm956, %v1890, %v1891
      %v1893 = vrot.slane %v1850, 1
      %v1894 = vrot.slane %v1851, 1
      %v1895 = vsel %vm956, %v1893, %v1894
      %v1896 = vrot.slane %v1852, 1
      %v1897 = vrot.slane %v1853, 1
      %v1898 = vsel %vm956, %v1896, %v1897
      %v1899 = vrot.slane %v1854, 1
      %v1900 = vrot.slane %v1855, 1
      %v1901 = vsel %vm956, %v1899, %v1900
      %v1902 = vrot.slane %v1856, 1
      %v1903 = vrot.slane %v1857, 1
      %v1904 = vsel %vm956, %v1902, %v1903
      %v1905 = vrot.slane %v1858, 1
      %v1906 = vrot.slane %v1859, 1
      %v1907 = vsel %vm956, %v1905, %v1906
      %1908 = vrot.lane.b32.xlu0 %v1862, 20
      %v1909 = vpop.permute.xlu0 %1908
      %1910 = vrot.lane.b32.xlu0 %v1865, 20
      %v1911 = vpop.permute.xlu0 %1910
      %1912 = vrot.lane.b32.xlu0 %v1868, 20
      %v1913 = vpop.permute.xlu0 %1912
      %1914 = vrot.lane.b32.xlu0 %v1871, 20
      %v1915 = vpop.permute.xlu0 %1914
      %1916 = vrot.lane.b32.xlu0 %v1874, 20
      %v1917 = vpop.permute.xlu0 %1916
      %1918 = vrot.lane.b32.xlu0 %v1877, 20
      %v1919 = vpop.permute.xlu0 %1918
      %1920 = vrot.lane.b32.xlu0 %v1880, 20
      %v1921 = vpop.permute.xlu0 %1920
      %1922 = vrot.lane.b32.xlu0 %v1883, 20
      %v1923 = vpop.permute.xlu0 %1922
      %1924 = vrot.lane.b32.xlu0 %v1886, 20
      %v1925 = vpop.permute.xlu0 %1924
      %1926 = vrot.lane.b32.xlu0 %v1889, 20
      %v1927 = vpop.permute.xlu0 %1926
      %1928 = vrot.lane.b32.xlu0 %v1892, 20
      %v1929 = vpop.permute.xlu0 %1928
      %1930 = vrot.lane.b32.xlu0 %v1895, 20
      %v1931 = vpop.permute.xlu0 %1930
      %1932 = vrot.lane.b32.xlu0 %v1898, 20
      %v1933 = vpop.permute.xlu0 %1932
      %1934 = vrot.lane.b32.xlu0 %v1901, 20
      %v1935 = vpop.permute.xlu0 %1934
      %1936 = vrot.lane.b32.xlu0 %v1904, 20
      %v1937 = vpop.permute.xlu0 %1936
      %1938 = vrot.lane.b32.xlu0 %v1907, 20
      %v1939 = vpop.permute.xlu0 %1938
      %vm1956 = vcmask 195744
      %1957 = vst.msk [vmem:[#allocation2] sm:$0xff] %vm1956, %v1909
      %1958 = vst.msk [vmem:[#allocation2 + $0x8] sm:$0xff] %vm1956, %v1911
      %1959 = vst.msk [vmem:[#allocation2 + $0x10] sm:$0xff] %vm1956, %v1913
      %1960 = vst.msk [vmem:[#allocation2 + $0x18] sm:$0xff] %vm1956, %v1915
      %1961 = vst.msk [vmem:[#allocation2 + $0x20] sm:$0xff] %vm1956, %v1917
      %1962 = vst.msk [vmem:[#allocation2 + $0x28] sm:$0xff] %vm1956, %v1919
      %1963 = vst.msk [vmem:[#allocation2 + $0x30] sm:$0xff] %vm1956, %v1921
      %1964 = vst.msk [vmem:[#allocation2 + $0x38] sm:$0xff] %vm1956, %v1923
      %1965 = vst.msk [vmem:[#allocation2 + $0x40] sm:$0xff] %vm1956, %v1925
      %1966 = vst.msk [vmem:[#allocation2 + $0x48] sm:$0xff] %vm1956, %v1927
      %1967 = vst.msk [vmem:[#allocation2 + $0x50] sm:$0xff] %vm1956, %v1929
      %1968 = vst.msk [vmem:[#allocation2 + $0x58] sm:$0xff] %vm1956, %v1931
      %1969 = vst.msk [vmem:[#allocation2 + $0x60] sm:$0xff] %vm1956, %v1933
      %1970 = vst.msk [vmem:[#allocation2 + $0x68] sm:$0xff] %vm1956, %v1935
      %1971 = vst.msk [vmem:[#allocation2 + $0x70] sm:$0xff] %vm1956, %v1937
      %1972 = vst.msk [vmem:[#allocation2 + $0x78] sm:$0xff] %vm1956, %v1939
      %s1973 = sadd.s32 %s197, 2
      %s1974 = smul.u32 %s1973, 3
      %s1975 = smul.addr %s1974, 4
      %s1976 = scalar_lea.vmem %s184, %s1975
      %v1977 = vld [vmem:[%s1976] sm:$0xf]
      %v1978 = vld [vmem:[%s1976 + $0x4] sm:$0xf]
      %v1979 = vld [vmem:[%s1976 + $0xc] sm:$0xf]
      %v1980 = vld [vmem:[%s1976 + $0x10] sm:$0xf]
      %v1981 = vld [vmem:[%s1976 + $0x18] sm:$0xf]
      %v1982 = vld [vmem:[%s1976 + $0x1c] sm:$0xf]
      %v1983 = vld [vmem:[%s1976 + $0x24] sm:$0xf]
      %v1984 = vld [vmem:[%s1976 + $0x28] sm:$0xf]
      %v1985 = vld [vmem:[%s1976 + $0x30] sm:$0xf]
      %v1986 = vld [vmem:[%s1976 + $0x34] sm:$0xf]
      %v1987 = vld [vmem:[%s1976 + $0x3c] sm:$0xf]
      %v1988 = vld [vmem:[%s1976 + $0x40] sm:$0xf]
      %v1989 = vld [vmem:[%s1976 + $0x48] sm:$0xf]
      %v1990 = vld [vmem:[%s1976 + $0x4c] sm:$0xf]
      %v1991 = vld [vmem:[%s1976 + $0x54] sm:$0xf]
      %v1992 = vld [vmem:[%s1976 + $0x58] sm:$0xf]
      %v1993 = vld [vmem:[%s1976 + $0x60] sm:$0xf]
      %v1994 = vld [vmem:[%s1976 + $0x64] sm:$0xf]
      %v1995 = vld [vmem:[%s1976 + $0x6c] sm:$0xf]
      %v1996 = vld [vmem:[%s1976 + $0x70] sm:$0xf]
      %v1997 = vld [vmem:[%s1976 + $0x78] sm:$0xf]
      %v1998 = vld [vmem:[%s1976 + $0x7c] sm:$0xf]
      %v1999 = vld [vmem:[%s1976 + $0x84] sm:$0xf]
      %v2000 = vld [vmem:[%s1976 + $0x88] sm:$0xf]
      %v2001 = vld [vmem:[%s1976 + $0x90] sm:$0xf]
      %v2002 = vld [vmem:[%s1976 + $0x94] sm:$0xf]
      %v2003 = vld [vmem:[%s1976 + $0x9c] sm:$0xf]
      %v2004 = vld [vmem:[%s1976 + $0xa0] sm:$0xf]
      %v2005 = vld [vmem:[%s1976 + $0xa8] sm:$0xf]
      %v2006 = vld [vmem:[%s1976 + $0xac] sm:$0xf]
      %v2007 = vld [vmem:[%s1976 + $0xb4] sm:$0xf]
      %v2008 = vld [vmem:[%s1976 + $0xb8] sm:$0xf]
      %v2041 = vunpack.c.l.b16 %v1977
      %v2042 = vunpack.c.l.b16 %v1978
      %v2043 = vunpack.c.l.b16 %v1979
      %v2044 = vunpack.c.l.b16 %v1980
      %v2045 = vunpack.c.l.b16 %v1981
      %v2046 = vunpack.c.l.b16 %v1982
      %v2047 = vunpack.c.l.b16 %v1983
      %v2048 = vunpack.c.l.b16 %v1984
      %v2049 = vunpack.c.l.b16 %v1985
      %v2050 = vunpack.c.l.b16 %v1986
      %v2051 = vunpack.c.l.b16 %v1987
      %v2052 = vunpack.c.l.b16 %v1988
      %v2053 = vunpack.c.l.b16 %v1989
      %v2054 = vunpack.c.l.b16 %v1990
      %v2055 = vunpack.c.l.b16 %v1991
      %v2056 = vunpack.c.l.b16 %v1992
      %v2057 = vunpack.c.l.b16 %v1993
      %v2058 = vunpack.c.l.b16 %v1994
      %v2059 = vunpack.c.l.b16 %v1995
      %v2060 = vunpack.c.l.b16 %v1996
      %v2061 = vunpack.c.l.b16 %v1997
      %v2062 = vunpack.c.l.b16 %v1998
      %v2063 = vunpack.c.l.b16 %v1999
      %v2064 = vunpack.c.l.b16 %v2000
      %v2065 = vunpack.c.l.b16 %v2001
      %v2066 = vunpack.c.l.b16 %v2002
      %v2067 = vunpack.c.l.b16 %v2003
      %v2068 = vunpack.c.l.b16 %v2004
      %v2069 = vunpack.c.l.b16 %v2005
      %v2070 = vunpack.c.l.b16 %v2006
      %v2071 = vunpack.c.l.b16 %v2007
      %v2072 = vunpack.c.l.b16 %v2008
      %v2073 = vpack.c.b16 %v2042, %v2041
      %v2074 = vpack.c.b16 %v2044, %v2043
      %v2075 = vpack.c.b16 %v2046, %v2045
      %v2076 = vpack.c.b16 %v2048, %v2047
      %v2077 = vpack.c.b16 %v2050, %v2049
      %v2078 = vpack.c.b16 %v2052, %v2051
      %v2079 = vpack.c.b16 %v2054, %v2053
      %v2080 = vpack.c.b16 %v2056, %v2055
      %v2081 = vpack.c.b16 %v2058, %v2057
      %v2082 = vpack.c.b16 %v2060, %v2059
      %v2083 = vpack.c.b16 %v2062, %v2061
      %v2084 = vpack.c.b16 %v2064, %v2063
      %v2085 = vpack.c.b16 %v2066, %v2065
      %v2086 = vpack.c.b16 %v2068, %v2067
      %v2087 = vpack.c.b16 %v2070, %v2069
      %v2088 = vpack.c.b16 %v2072, %v2071
      %2089 = vrot.lane.b32.xlu0 %v2073, 24
      %v2090 = vpop.permute.xlu0 %2089
      %2091 = vrot.lane.b32.xlu0 %v2074, 24
      %v2092 = vpop.permute.xlu0 %2091
      %2093 = vrot.lane.b32.xlu0 %v2075, 24
      %v2094 = vpop.permute.xlu0 %2093
      %2095 = vrot.lane.b32.xlu0 %v2076, 24
      %v2096 = vpop.permute.xlu0 %2095
      %2097 = vrot.lane.b32.xlu0 %v2077, 24
      %v2098 = vpop.permute.xlu0 %2097
      %2099 = vrot.lane.b32.xlu0 %v2078, 24
      %v2100 = vpop.permute.xlu0 %2099
      %2101 = vrot.lane.b32.xlu0 %v2079, 24
      %v2102 = vpop.permute.xlu0 %2101
      %2103 = vrot.lane.b32.xlu0 %v2080, 24
      %v2104 = vpop.permute.xlu0 %2103
      %2105 = vrot.lane.b32.xlu0 %v2081, 24
      %v2106 = vpop.permute.xlu0 %2105
      %2107 = vrot.lane.b32.xlu0 %v2082, 24
      %v2108 = vpop.permute.xlu0 %2107
      %2109 = vrot.lane.b32.xlu0 %v2083, 24
      %v2110 = vpop.permute.xlu0 %2109
      %2111 = vrot.lane.b32.xlu0 %v2084, 24
      %v2112 = vpop.permute.xlu0 %2111
      %2113 = vrot.lane.b32.xlu0 %v2085, 24
      %v2114 = vpop.permute.xlu0 %2113
      %2115 = vrot.lane.b32.xlu0 %v2086, 24
      %v2116 = vpop.permute.xlu0 %2115
      %2117 = vrot.lane.b32.xlu0 %v2087, 24
      %v2118 = vpop.permute.xlu0 %2117
      %2119 = vrot.lane.b32.xlu0 %v2088, 24
      %v2120 = vpop.permute.xlu0 %2119
      %vm2137 = vcmask 228544
      %2138 = vst.msk [vmem:[#allocation2] sm:$0xff] %vm2137, %v2090
      %2139 = vst.msk [vmem:[#allocation2 + $0x8] sm:$0xff] %vm2137, %v2092
      %2140 = vst.msk [vmem:[#allocation2 + $0x10] sm:$0xff] %vm2137, %v2094
      %2141 = vst.msk [vmem:[#allocation2 + $0x18] sm:$0xff] %vm2137, %v2096
      %2142 = vst.msk [vmem:[#allocation2 + $0x20] sm:$0xff] %vm2137, %v2098
      %2143 = vst.msk [vmem:[#allocation2 + $0x28] sm:$0xff] %vm2137, %v2100
      %2144 = vst.msk [vmem:[#allocation2 + $0x30] sm:$0xff] %vm2137, %v2102
      %2145 = vst.msk [vmem:[#allocation2 + $0x38] sm:$0xff] %vm2137, %v2104
      %2146 = vst.msk [vmem:[#allocation2 + $0x40] sm:$0xff] %vm2137, %v2106
      %2147 = vst.msk [vmem:[#allocation2 + $0x48] sm:$0xff] %vm2137, %v2108
      %2148 = vst.msk [vmem:[#allocation2 + $0x50] sm:$0xff] %vm2137, %v2110
      %2149 = vst.msk [vmem:[#allocation2 + $0x58] sm:$0xff] %vm2137, %v2112
      %2150 = vst.msk [vmem:[#allocation2 + $0x60] sm:$0xff] %vm2137, %v2114
      %2151 = vst.msk [vmem:[#allocation2 + $0x68] sm:$0xff] %vm2137, %v2116
      %2152 = vst.msk [vmem:[#allocation2 + $0x70] sm:$0xff] %vm2137, %v2118
      %2153 = vst.msk [vmem:[#allocation2 + $0x78] sm:$0xff] %vm2137, %v2120
      %v2154 = vld [vmem:[%s1976] sm:$0xf]
      %v2155 = vld [vmem:[%s1976 + $0x4] sm:$0xf]
      %v2156 = vld [vmem:[%s1976 + $0x8] sm:$0x1]
      %v2157 = vld [vmem:[%s1976 + $0xc] sm:$0xf]
      %v2158 = vld [vmem:[%s1976 + $0x10] sm:$0xf]
      %v2159 = vld [vmem:[%s1976 + $0x14] sm:$0x1]
      %v2160 = vld [vmem:[%s1976 + $0x18] sm:$0xf]
      %v2161 = vld [vmem:[%s1976 + $0x1c] sm:$0xf]
      %v2162 = vld [vmem:[%s1976 + $0x20] sm:$0x1]
      %v2163 = vld [vmem:[%s1976 + $0x24] sm:$0xf]
      %v2164 = vld [vmem:[%s1976 + $0x28] sm:$0xf]
      %v2165 = vld [vmem:[%s1976 + $0x2c] sm:$0x1]
      %v2166 = vld [vmem:[%s1976 + $0x30] sm:$0xf]
      %v2167 = vld [vmem:[%s1976 + $0x34] sm:$0xf]
      %v2168 = vld [vmem:[%s1976 + $0x38] sm:$0x1]
      %v2169 = vld [vmem:[%s1976 + $0x3c] sm:$0xf]
      %v2170 = vld [vmem:[%s1976 + $0x40] sm:$0xf]
      %v2171 = vld [vmem:[%s1976 + $0x44] sm:$0x1]
      %v2172 = vld [vmem:[%s1976 + $0x48] sm:$0xf]
      %v2173 = vld [vmem:[%s1976 + $0x4c] sm:$0xf]
      %v2174 = vld [vmem:[%s1976 + $0x50] sm:$0x1]
      %v2175 = vld [vmem:[%s1976 + $0x54] sm:$0xf]
      %v2176 = vld [vmem:[%s1976 + $0x58] sm:$0xf]
      %v2177 = vld [vmem:[%s1976 + $0x5c] sm:$0x1]
      %v2178 = vld [vmem:[%s1976 + $0x60] sm:$0xf]
      %v2179 = vld [vmem:[%s1976 + $0x64] sm:$0xf]
      %v2180 = vld [vmem:[%s1976 + $0x68] sm:$0x1]
      %v2181 = vld [vmem:[%s1976 + $0x6c] sm:$0xf]
      %v2182 = vld [vmem:[%s1976 + $0x70] sm:$0xf]
      %v2183 = vld [vmem:[%s1976 + $0x74] sm:$0x1]
      %v2184 = vld [vmem:[%s1976 + $0x78] sm:$0xf]
      %v2185 = vld [vmem:[%s1976 + $0x7c] sm:$0xf]
      %v2186 = vld [vmem:[%s1976 + $0x80] sm:$0x1]
      %v2187 = vld [vmem:[%s1976 + $0x84] sm:$0xf]
      %v2188 = vld [vmem:[%s1976 + $0x88] sm:$0xf]
      %v2189 = vld [vmem:[%s1976 + $0x8c] sm:$0x1]
      %v2190 = vld [vmem:[%s1976 + $0x90] sm:$0xf]
      %v2191 = vld [vmem:[%s1976 + $0x94] sm:$0xf]
      %v2192 = vld [vmem:[%s1976 + $0x98] sm:$0x1]
      %v2193 = vld [vmem:[%s1976 + $0x9c] sm:$0xf]
      %v2194 = vld [vmem:[%s1976 + $0xa0] sm:$0xf]
      %v2195 = vld [vmem:[%s1976 + $0xa4] sm:$0x1]
      %v2196 = vld [vmem:[%s1976 + $0xa8] sm:$0xf]
      %v2197 = vld [vmem:[%s1976 + $0xac] sm:$0xf]
      %v2198 = vld [vmem:[%s1976 + $0xb0] sm:$0x1]
      %v2199 = vld [vmem:[%s1976 + $0xb4] sm:$0xf]
      %v2200 = vld [vmem:[%s1976 + $0xb8] sm:$0xf]
      %v2201 = vld [vmem:[%s1976 + $0xbc] sm:$0x1]
      %v2250 = vunpack.c.l.b16 %v2154
      %v2251 = vunpack.c.l.b16 %v2155
      %v2252 = vunpack.c.l.b16 %v2156
      %v2253 = vunpack.c.l.b16 %v2157
      %v2254 = vunpack.c.l.b16 %v2158
      %v2255 = vunpack.c.l.b16 %v2159
      %v2256 = vunpack.c.l.b16 %v2160
      %v2257 = vunpack.c.l.b16 %v2161
      %v2258 = vunpack.c.l.b16 %v2162
      %v2259 = vunpack.c.l.b16 %v2163
      %v2260 = vunpack.c.l.b16 %v2164
      %v2261 = vunpack.c.l.b16 %v2165
      %v2262 = vunpack.c.l.b16 %v2166
      %v2263 = vunpack.c.l.b16 %v2167
      %v2264 = vunpack.c.l.b16 %v2168
      %v2265 = vunpack.c.l.b16 %v2169
      %v2266 = vunpack.c.l.b16 %v2170
      %v2267 = vunpack.c.l.b16 %v2171
      %v2268 = vunpack.c.l.b16 %v2172
      %v2269 = vunpack.c.l.b16 %v2173
      %v2270 = vunpack.c.l.b16 %v2174
      %v2271 = vunpack.c.l.b16 %v2175
      %v2272 = vunpack.c.l.b16 %v2176
      %v2273 = vunpack.c.l.b16 %v2177
      %v2274 = vunpack.c.l.b16 %v2178
      %v2275 = vunpack.c.l.b16 %v2179
      %v2276 = vunpack.c.l.b16 %v2180
      %v2277 = vunpack.c.l.b16 %v2181
      %v2278 = vunpack.c.l.b16 %v2182
      %v2279 = vunpack.c.l.b16 %v2183
      %v2280 = vunpack.c.l.b16 %v2184
      %v2281 = vunpack.c.l.b16 %v2185
      %v2282 = vunpack.c.l.b16 %v2186
      %v2283 = vunpack.c.l.b16 %v2187
      %v2284 = vunpack.c.l.b16 %v2188
      %v2285 = vunpack.c.l.b16 %v2189
      %v2286 = vunpack.c.l.b16 %v2190
      %v2287 = vunpack.c.l.b16 %v2191
      %v2288 = vunpack.c.l.b16 %v2192
      %v2289 = vunpack.c.l.b16 %v2193
      %v2290 = vunpack.c.l.b16 %v2194
      %v2291 = vunpack.c.l.b16 %v2195
      %v2292 = vunpack.c.l.b16 %v2196
      %v2293 = vunpack.c.l.b16 %v2197
      %v2294 = vunpack.c.l.b16 %v2198
      %v2295 = vunpack.c.l.b16 %v2199
      %v2296 = vunpack.c.l.b16 %v2200
      %v2297 = vunpack.c.l.b16 %v2201
      %v2298 = vpack.c.b16 %v2251, %v2250
      %v2299 = vpack.c.b16 %v2252, %v2252
      %v2300 = vpack.c.b16 %v2254, %v2253
      %v2301 = vpack.c.b16 %v2255, %v2255
      %v2302 = vpack.c.b16 %v2257, %v2256
      %v2303 = vpack.c.b16 %v2258, %v2258
      %v2304 = vpack.c.b16 %v2260, %v2259
      %v2305 = vpack.c.b16 %v2261, %v2261
      %v2306 = vpack.c.b16 %v2263, %v2262
      %v2307 = vpack.c.b16 %v2264, %v2264
      %v2308 = vpack.c.b16 %v2266, %v2265
      %v2309 = vpack.c.b16 %v2267, %v2267
      %v2310 = vpack.c.b16 %v2269, %v2268
      %v2311 = vpack.c.b16 %v2270, %v2270
      %v2312 = vpack.c.b16 %v2272, %v2271
      %v2313 = vpack.c.b16 %v2273, %v2273
      %v2314 = vpack.c.b16 %v2275, %v2274
      %v2315 = vpack.c.b16 %v2276, %v2276
      %v2316 = vpack.c.b16 %v2278, %v2277
      %v2317 = vpack.c.b16 %v2279, %v2279
      %v2318 = vpack.c.b16 %v2281, %v2280
      %v2319 = vpack.c.b16 %v2282, %v2282
      %v2320 = vpack.c.b16 %v2284, %v2283
      %v2321 = vpack.c.b16 %v2285, %v2285
      %v2322 = vpack.c.b16 %v2287, %v2286
      %v2323 = vpack.c.b16 %v2288, %v2288
      %v2324 = vpack.c.b16 %v2290, %v2289
      %v2325 = vpack.c.b16 %v2291, %v2291
      %v2326 = vpack.c.b16 %v2293, %v2292
      %v2327 = vpack.c.b16 %v2294, %v2294
      %v2328 = vpack.c.b16 %v2296, %v2295
      %v2329 = vpack.c.b16 %v2297, %v2297
      %v2331 = vshrl.u32 %v2298, 16
      %v2333 = vshll.u32 %v2298, 16
      %v2335 = vrot.slane %v2333, 1
      %v2336 = vor.u32 %v2331, %v2335
      %v2338 = vshll.u32 %v2299, 16
      %v2340 = vrot.slane %v2338, 1
      %v2341 = vsel %vm522, %v2336, %v2340
      %v2343 = vshrl.u32 %v2300, 16
      %v2345 = vshll.u32 %v2300, 16
      %v2347 = vrot.slane %v2345, 1
      %v2348 = vor.u32 %v2343, %v2347
      %v2350 = vshll.u32 %v2301, 16
      %v2352 = vrot.slane %v2350, 1
      %v2353 = vsel %vm522, %v2348, %v2352
      %v2355 = vshrl.u32 %v2302, 16
      %v2357 = vshll.u32 %v2302, 16
      %v2359 = vrot.slane %v2357, 1
      %v2360 = vor.u32 %v2355, %v2359
      %v2362 = vshll.u32 %v2303, 16
      %v2364 = vrot.slane %v2362, 1
      %v2365 = vsel %vm522, %v2360, %v2364
      %v2367 = vshrl.u32 %v2304, 16
      %v2369 = vshll.u32 %v2304, 16
      %v2371 = vrot.slane %v2369, 1
      %v2372 = vor.u32 %v2367, %v2371
      %v2374 = vshll.u32 %v2305, 16
      %v2376 = vrot.slane %v2374, 1
      %v2377 = vsel %vm522, %v2372, %v2376
      %v2379 = vshrl.u32 %v2306, 16
      %v2381 = vshll.u32 %v2306, 16
      %v2383 = vrot.slane %v2381, 1
      %v2384 = vor.u32 %v2379, %v2383
      %v2386 = vshll.u32 %v2307, 16
      %v2388 = vrot.slane %v2386, 1
      %v2389 = vsel %vm522, %v2384, %v2388
      %v2391 = vshrl.u32 %v2308, 16
      %v2393 = vshll.u32 %v2308, 16
      %v2395 = vrot.slane %v2393, 1
      %v2396 = vor.u32 %v2391, %v2395
      %v2398 = vshll.u32 %v2309, 16
      %v2400 = vrot.slane %v2398, 1
      %v2401 = vsel %vm522, %v2396, %v2400
      %v2403 = vshrl.u32 %v2310, 16
      %v2405 = vshll.u32 %v2310, 16
      %v2407 = vrot.slane %v2405, 1
      %v2408 = vor.u32 %v2403, %v2407
      %v2410 = vshll.u32 %v2311, 16
      %v2412 = vrot.slane %v2410, 1
      %v2413 = vsel %vm522, %v2408, %v2412
      %v2415 = vshrl.u32 %v2312, 16
      %v2417 = vshll.u32 %v2312, 16
      %v2419 = vrot.slane %v2417, 1
      %v2420 = vor.u32 %v2415, %v2419
      %v2422 = vshll.u32 %v2313, 16
      %v2424 = vrot.slane %v2422, 1
      %v2425 = vsel %vm522, %v2420, %v2424
      %v2427 = vshrl.u32 %v2314, 16
      %v2429 = vshll.u32 %v2314, 16
      %v2431 = vrot.slane %v2429, 1
      %v2432 = vor.u32 %v2427, %v2431
      %v2434 = vshll.u32 %v2315, 16
      %v2436 = vrot.slane %v2434, 1
      %v2437 = vsel %vm522, %v2432, %v2436
      %v2439 = vshrl.u32 %v2316, 16
      %v2441 = vshll.u32 %v2316, 16
      %v2443 = vrot.slane %v2441, 1
      %v2444 = vor.u32 %v2439, %v2443
      %v2446 = vshll.u32 %v2317, 16
      %v2448 = vrot.slane %v2446, 1
      %v2449 = vsel %vm522, %v2444, %v2448
      %v2451 = vshrl.u32 %v2318, 16
      %v2453 = vshll.u32 %v2318, 16
      %v2455 = vrot.slane %v2453, 1
      %v2456 = vor.u32 %v2451, %v2455
      %v2458 = vshll.u32 %v2319, 16
      %v2460 = vrot.slane %v2458, 1
      %v2461 = vsel %vm522, %v2456, %v2460
      %v2463 = vshrl.u32 %v2320, 16
      %v2465 = vshll.u32 %v2320, 16
      %v2467 = vrot.slane %v2465, 1
      %v2468 = vor.u32 %v2463, %v2467
      %v2470 = vshll.u32 %v2321, 16
      %v2472 = vrot.slane %v2470, 1
      %v2473 = vsel %vm522, %v2468, %v2472
      %v2475 = vshrl.u32 %v2322, 16
      %v2477 = vshll.u32 %v2322, 16
      %v2479 = vrot.slane %v2477, 1
      %v2480 = vor.u32 %v2475, %v2479
      %v2482 = vshll.u32 %v2323, 16
      %v2484 = vrot.slane %v2482, 1
      %v2485 = vsel %vm522, %v2480, %v2484
      %v2487 = vshrl.u32 %v2324, 16
      %v2489 = vshll.u32 %v2324, 16
      %v2491 = vrot.slane %v2489, 1
      %v2492 = vor.u32 %v2487, %v2491
      %v2494 = vshll.u32 %v2325, 16
      %v2496 = vrot.slane %v2494, 1
      %v2497 = vsel %vm522, %v2492, %v2496
      %v2499 = vshrl.u32 %v2326, 16
      %v2501 = vshll.u32 %v2326, 16
      %v2503 = vrot.slane %v2501, 1
      %v2504 = vor.u32 %v2499, %v2503
      %v2506 = vshll.u32 %v2327, 16
      %v2508 = vrot.slane %v2506, 1
      %v2509 = vsel %vm522, %v2504, %v2508
      %v2511 = vshrl.u32 %v2328, 16
      %v2513 = vshll.u32 %v2328, 16
      %v2515 = vrot.slane %v2513, 1
      %v2516 = vor.u32 %v2511, %v2515
      %v2518 = vshll.u32 %v2329, 16
      %v2520 = vrot.slane %v2518, 1
      %v2521 = vsel %vm522, %v2516, %v2520
      %2522 = vrot.lane.b32.xlu0 %v2341, 28
      %v2523 = vpop.permute.xlu0 %2522
      %2524 = vrot.lane.b32.xlu0 %v2353, 28
      %v2525 = vpop.permute.xlu0 %2524
      %2526 = vrot.lane.b32.xlu0 %v2365, 28
      %v2527 = vpop.permute.xlu0 %2526
      %2528 = vrot.lane.b32.xlu0 %v2377, 28
      %v2529 = vpop.permute.xlu0 %2528
      %2530 = vrot.lane.b32.xlu0 %v2389, 28
      %v2531 = vpop.permute.xlu0 %2530
      %2532 = vrot.lane.b32.xlu0 %v2401, 28
      %v2533 = vpop.permute.xlu0 %2532
      %2534 = vrot.lane.b32.xlu0 %v2413, 28
      %v2535 = vpop.permute.xlu0 %2534
      %2536 = vrot.lane.b32.xlu0 %v2425, 28
      %v2537 = vpop.permute.xlu0 %2536
      %2538 = vrot.lane.b32.xlu0 %v2437, 28
      %v2539 = vpop.permute.xlu0 %2538
      %2540 = vrot.lane.b32.xlu0 %v2449, 28
      %v2541 = vpop.permute.xlu0 %2540
      %2542 = vrot.lane.b32.xlu0 %v2461, 28
      %v2543 = vpop.permute.xlu0 %2542
      %2544 = vrot.lane.b32.xlu0 %v2473, 28
      %v2545 = vpop.permute.xlu0 %2544
      %2546 = vrot.lane.b32.xlu0 %v2485, 28
      %v2547 = vpop.permute.xlu0 %2546
      %2548 = vrot.lane.b32.xlu0 %v2497, 28
      %v2549 = vpop.permute.xlu0 %2548
      %2550 = vrot.lane.b32.xlu0 %v2509, 28
      %v2551 = vpop.permute.xlu0 %2550
      %2552 = vrot.lane.b32.xlu0 %v2521, 28
      %v2553 = vpop.permute.xlu0 %2552
      %vm2570 = vcmask 261344
      %2571 = vst.msk [vmem:[#allocation2] sm:$0xff] %vm2570, %v2523
      %2572 = vst.msk [vmem:[#allocation2 + $0x8] sm:$0xff] %vm2570, %v2525
      %2573 = vst.msk [vmem:[#allocation2 + $0x10] sm:$0xff] %vm2570, %v2527
      %2574 = vst.msk [vmem:[#allocation2 + $0x18] sm:$0xff] %vm2570, %v2529
      %2575 = vst.msk [vmem:[#allocation2 + $0x20] sm:$0xff] %vm2570, %v2531
      %2576 = vst.msk [vmem:[#allocation2 + $0x28] sm:$0xff] %vm2570, %v2533
      %2577 = vst.msk [vmem:[#allocation2 + $0x30] sm:$0xff] %vm2570, %v2535
      %2578 = vst.msk [vmem:[#allocation2 + $0x38] sm:$0xff] %vm2570, %v2537
      %2579 = vst.msk [vmem:[#allocation2 + $0x40] sm:$0xff] %vm2570, %v2539
      %2580 = vst.msk [vmem:[#allocation2 + $0x48] sm:$0xff] %vm2570, %v2541
      %2581 = vst.msk [vmem:[#allocation2 + $0x50] sm:$0xff] %vm2570, %v2543
      %2582 = vst.msk [vmem:[#allocation2 + $0x58] sm:$0xff] %vm2570, %v2545
      %2583 = vst.msk [vmem:[#allocation2 + $0x60] sm:$0xff] %vm2570, %v2547
      %2584 = vst.msk [vmem:[#allocation2 + $0x68] sm:$0xff] %vm2570, %v2549
      %2585 = vst.msk [vmem:[#allocation2 + $0x70] sm:$0xff] %vm2570, %v2551
      %2586 = vst.msk [vmem:[#allocation2 + $0x78] sm:$0xff] %vm2570, %v2553
      %v2587 = vld [vmem:[%s1976] sm:$0xe]
      %v2588 = vld [vmem:[%s1976 + $0x4] sm:$0xf]
      %v2589 = vld [vmem:[%s1976 + $0x8] sm:$0x1]
      %v2590 = vld [vmem:[%s1976 + $0xc] sm:$0xe]
      %v2591 = vld [vmem:[%s1976 + $0x10] sm:$0xf]
      %v2592 = vld [vmem:[%s1976 + $0x14] sm:$0x1]
      %v2593 = vld [vmem:[%s1976 + $0x18] sm:$0xe]
      %v2594 = vld [vmem:[%s1976 + $0x1c] sm:$0xf]
      %v2595 = vld [vmem:[%s1976 + $0x20] sm:$0x1]
      %v2596 = vld [vmem:[%s1976 + $0x24] sm:$0xe]
      %v2597 = vld [vmem:[%s1976 + $0x28] sm:$0xf]
      %v2598 = vld [vmem:[%s1976 + $0x2c] sm:$0x1]
      %v2599 = vld [vmem:[%s1976 + $0x30] sm:$0xe]
      %v2600 = vld [vmem:[%s1976 + $0x34] sm:$0xf]
      %v2601 = vld [vmem:[%s1976 + $0x38] sm:$0x1]
      %v2602 = vld [vmem:[%s1976 + $0x3c] sm:$0xe]
      %v2603 = vld [vmem:[%s1976 + $0x40] sm:$0xf]
      %v2604 = vld [vmem:[%s1976 + $0x44] sm:$0x1]
      %v2605 = vld [vmem:[%s1976 + $0x48] sm:$0xe]
      %v2606 = vld [vmem:[%s1976 + $0x4c] sm:$0xf]
      %v2607 = vld [vmem:[%s1976 + $0x50] sm:$0x1]
      %v2608 = vld [vmem:[%s1976 + $0x54] sm:$0xe]
      %v2609 = vld [vmem:[%s1976 + $0x58] sm:$0xf]
      %v2610 = vld [vmem:[%s1976 + $0x5c] sm:$0x1]
      %v2611 = vld [vmem:[%s1976 + $0x60] sm:$0xe]
      %v2612 = vld [vmem:[%s1976 + $0x64] sm:$0xf]
      %v2613 = vld [vmem:[%s1976 + $0x68] sm:$0x1]
      %v2614 = vld [vmem:[%s1976 + $0x6c] sm:$0xe]
      %v2615 = vld [vmem:[%s1976 + $0x70] sm:$0xf]
      %v2616 = vld [vmem:[%s1976 + $0x74] sm:$0x1]
      %v2617 = vld [vmem:[%s1976 + $0x78] sm:$0xe]
      %v2618 = vld [vmem:[%s1976 + $0x7c] sm:$0xf]
      %v2619 = vld [vmem:[%s1976 + $0x80] sm:$0x1]
      %v2620 = vld [vmem:[%s1976 + $0x84] sm:$0xe]
      %v2621 = vld [vmem:[%s1976 + $0x88] sm:$0xf]
      %v2622 = vld [vmem:[%s1976 + $0x8c] sm:$0x1]
      %v2623 = vld [vmem:[%s1976 + $0x90] sm:$0xe]
      %v2624 = vld [vmem:[%s1976 + $0x94] sm:$0xf]
      %v2625 = vld [vmem:[%s1976 + $0x98] sm:$0x1]
      %v2626 = vld [vmem:[%s1976 + $0x9c] sm:$0xe]
      %v2627 = vld [vmem:[%s1976 + $0xa0] sm:$0xf]
      %v2628 = vld [vmem:[%s1976 + $0xa4] sm:$0x1]
      %v2629 = vld [vmem:[%s1976 + $0xa8] sm:$0xe]
      %v2630 = vld [vmem:[%s1976 + $0xac] sm:$0xf]
      %v2631 = vld [vmem:[%s1976 + $0xb0] sm:$0x1]
      %v2632 = vld [vmem:[%s1976 + $0xb4] sm:$0xe]
      %v2633 = vld [vmem:[%s1976 + $0xb8] sm:$0xf]
      %v2634 = vld [vmem:[%s1976 + $0xbc] sm:$0x1]
      %v2683 = vunpack.c.l.b16 %v2587
      %v2684 = vunpack.c.l.b16 %v2588
      %v2685 = vunpack.c.l.b16 %v2589
      %v2686 = vunpack.c.l.b16 %v2590
      %v2687 = vunpack.c.l.b16 %v2591
      %v2688 = vunpack.c.l.b16 %v2592
      %v2689 = vunpack.c.l.b16 %v2593
      %v2690 = vunpack.c.l.b16 %v2594
      %v2691 = vunpack.c.l.b16 %v2595
      %v2692 = vunpack.c.l.b16 %v2596
      %v2693 = vunpack.c.l.b16 %v2597
      %v2694 = vunpack.c.l.b16 %v2598
      %v2695 = vunpack.c.l.b16 %v2599
      %v2696 = vunpack.c.l.b16 %v2600
      %v2697 = vunpack.c.l.b16 %v2601
      %v2698 = vunpack.c.l.b16 %v2602
      %v2699 = vunpack.c.l.b16 %v2603
      %v2700 = vunpack.c.l.b16 %v2604
      %v2701 = vunpack.c.l.b16 %v2605
      %v2702 = vunpack.c.l.b16 %v2606
      %v2703 = vunpack.c.l.b16 %v2607
      %v2704 = vunpack.c.l.b16 %v2608
      %v2705 = vunpack.c.l.b16 %v2609
      %v2706 = vunpack.c.l.b16 %v2610
      %v2707 = vunpack.c.l.b16 %v2611
      %v2708 = vunpack.c.l.b16 %v2612
      %v2709 = vunpack.c.l.b16 %v2613
      %v2710 = vunpack.c.l.b16 %v2614
      %v2711 = vunpack.c.l.b16 %v2615
      %v2712 = vunpack.c.l.b16 %v2616
      %v2713 = vunpack.c.l.b16 %v2617
      %v2714 = vunpack.c.l.b16 %v2618
      %v2715 = vunpack.c.l.b16 %v2619
      %v2716 = vunpack.c.l.b16 %v2620
      %v2717 = vunpack.c.l.b16 %v2621
      %v2718 = vunpack.c.l.b16 %v2622
      %v2719 = vunpack.c.l.b16 %v2623
      %v2720 = vunpack.c.l.b16 %v2624
      %v2721 = vunpack.c.l.b16 %v2625
      %v2722 = vunpack.c.l.b16 %v2626
      %v2723 = vunpack.c.l.b16 %v2627
      %v2724 = vunpack.c.l.b16 %v2628
      %v2725 = vunpack.c.l.b16 %v2629
      %v2726 = vunpack.c.l.b16 %v2630
      %v2727 = vunpack.c.l.b16 %v2631
      %v2728 = vunpack.c.l.b16 %v2632
      %v2729 = vunpack.c.l.b16 %v2633
      %v2730 = vunpack.c.l.b16 %v2634
      %v2731 = vpack.c.b16 %v2684, %v2683
      %v2732 = vpack.c.b16 %v2685, %v2685
      %v2733 = vpack.c.b16 %v2687, %v2686
      %v2734 = vpack.c.b16 %v2688, %v2688
      %v2735 = vpack.c.b16 %v2690, %v2689
      %v2736 = vpack.c.b16 %v2691, %v2691
      %v2737 = vpack.c.b16 %v2693, %v2692
      %v2738 = vpack.c.b16 %v2694, %v2694
      %v2739 = vpack.c.b16 %v2696, %v2695
      %v2740 = vpack.c.b16 %v2697, %v2697
      %v2741 = vpack.c.b16 %v2699, %v2698
      %v2742 = vpack.c.b16 %v2700, %v2700
      %v2743 = vpack.c.b16 %v2702, %v2701
      %v2744 = vpack.c.b16 %v2703, %v2703
      %v2745 = vpack.c.b16 %v2705, %v2704
      %v2746 = vpack.c.b16 %v2706, %v2706
      %v2747 = vpack.c.b16 %v2708, %v2707
      %v2748 = vpack.c.b16 %v2709, %v2709
      %v2749 = vpack.c.b16 %v2711, %v2710
      %v2750 = vpack.c.b16 %v2712, %v2712
      %v2751 = vpack.c.b16 %v2714, %v2713
      %v2752 = vpack.c.b16 %v2715, %v2715
      %v2753 = vpack.c.b16 %v2717, %v2716
      %v2754 = vpack.c.b16 %v2718, %v2718
      %v2755 = vpack.c.b16 %v2720, %v2719
      %v2756 = vpack.c.b16 %v2721, %v2721
      %v2757 = vpack.c.b16 %v2723, %v2722
      %v2758 = vpack.c.b16 %v2724, %v2724
      %v2759 = vpack.c.b16 %v2726, %v2725
      %v2760 = vpack.c.b16 %v2727, %v2727
      %v2761 = vpack.c.b16 %v2729, %v2728
      %v2762 = vpack.c.b16 %v2730, %v2730
      %v2763 = vrot.slane %v2731, 1
      %v2764 = vrot.slane %v2732, 1
      %v2765 = vsel %vm956, %v2763, %v2764
      %v2766 = vrot.slane %v2733, 1
      %v2767 = vrot.slane %v2734, 1
      %v2768 = vsel %vm956, %v2766, %v2767
      %v2769 = vrot.slane %v2735, 1
      %v2770 = vrot.slane %v2736, 1
      %v2771 = vsel %vm956, %v2769, %v2770
      %v2772 = vrot.slane %v2737, 1
      %v2773 = vrot.slane %v2738, 1
      %v2774 = vsel %vm956, %v2772, %v2773
      %v2775 = vrot.slane %v2739, 1
      %v2776 = vrot.slane %v2740, 1
      %v2777 = vsel %vm956, %v2775, %v2776
      %v2778 = vrot.slane %v2741, 1
      %v2779 = vrot.slane %v2742, 1
      %v2780 = vsel %vm956, %v2778, %v2779
      %v2781 = vrot.slane %v2743, 1
      %v2782 = vrot.slane %v2744, 1
      %v2783 = vsel %vm956, %v2781, %v2782
      %v2784 = vrot.slane %v2745, 1
      %v2785 = vrot.slane %v2746, 1
      %v2786 = vsel %vm956, %v2784, %v2785
      %v2787 = vrot.slane %v2747, 1
      %v2788 = vrot.slane %v2748, 1
      %v2789 = vsel %vm956, %v2787, %v2788
      %v2790 = vrot.slane %v2749, 1
      %v2791 = vrot.slane %v2750, 1
      %v2792 = vsel %vm956, %v2790, %v2791
      %v2793 = vrot.slane %v2751, 1
      %v2794 = vrot.slane %v2752, 1
      %v2795 = vsel %vm956, %v2793, %v2794
      %v2796 = vrot.slane %v2753, 1
      %v2797 = vrot.slane %v2754, 1
      %v2798 = vsel %vm956, %v2796, %v2797
      %v2799 = vrot.slane %v2755, 1
      %v2800 = vrot.slane %v2756, 1
      %v2801 = vsel %vm956, %v2799, %v2800
      %v2802 = vrot.slane %v2757, 1
      %v2803 = vrot.slane %v2758, 1
      %v2804 = vsel %vm956, %v2802, %v2803
      %v2805 = vrot.slane %v2759, 1
      %v2806 = vrot.slane %v2760, 1
      %v2807 = vsel %vm956, %v2805, %v2806
      %v2808 = vrot.slane %v2761, 1
      %v2809 = vrot.slane %v2762, 1
      %v2810 = vsel %vm956, %v2808, %v2809
      %2811 = vrot.lane.b32.xlu0 %v2765, 32
      %v2812 = vpop.permute.xlu0 %2811
      %2813 = vrot.lane.b32.xlu0 %v2768, 32
      %v2814 = vpop.permute.xlu0 %2813
      %2815 = vrot.lane.b32.xlu0 %v2771, 32
      %v2816 = vpop.permute.xlu0 %2815
      %2817 = vrot.lane.b32.xlu0 %v2774, 32
      %v2818 = vpop.permute.xlu0 %2817
      %2819 = vrot.lane.b32.xlu0 %v2777, 32
      %v2820 = vpop.permute.xlu0 %2819
      %2821 = vrot.lane.b32.xlu0 %v2780, 32
      %v2822 = vpop.permute.xlu0 %2821
      %2823 = vrot.lane.b32.xlu0 %v2783, 32
      %v2824 = vpop.permute.xlu0 %2823
      %2825 = vrot.lane.b32.xlu0 %v2786, 32
      %v2826 = vpop.permute.xlu0 %2825
      %2827 = vrot.lane.b32.xlu0 %v2789, 32
      %v2828 = vpop.permute.xlu0 %2827
      %2829 = vrot.lane.b32.xlu0 %v2792, 32
      %v2830 = vpop.permute.xlu0 %2829
      %2831 = vrot.lane.b32.xlu0 %v2795, 32
      %v2832 = vpop.permute.xlu0 %2831
      %2833 = vrot.lane.b32.xlu0 %v2798, 32
      %v2834 = vpop.permute.xlu0 %2833
      %2835 = vrot.lane.b32.xlu0 %v2801, 32
      %v2836 = vpop.permute.xlu0 %2835
      %2837 = vrot.lane.b32.xlu0 %v2804, 32
      %v2838 = vpop.permute.xlu0 %2837
      %2839 = vrot.lane.b32.xlu0 %v2807, 32
      %v2840 = vpop.permute.xlu0 %2839
      %2841 = vrot.lane.b32.xlu0 %v2810, 32
      %v2842 = vpop.permute.xlu0 %2841
      %vm2859 = vcmask 294144
      %2860 = vst.msk [vmem:[#allocation2] sm:$0xff] %vm2859, %v2812
      %2861 = vst.msk [vmem:[#allocation2 + $0x8] sm:$0xff] %vm2859, %v2814
      %2862 = vst.msk [vmem:[#allocation2 + $0x10] sm:$0xff] %vm2859, %v2816
      %2863 = vst.msk [vmem:[#allocation2 + $0x18] sm:$0xff] %vm2859, %v2818
      %2864 = vst.msk [vmem:[#allocation2 + $0x20] sm:$0xff] %vm2859, %v2820
      %2865 = vst.msk [vmem:[#allocation2 + $0x28] sm:$0xff] %vm2859, %v2822
      %2866 = vst.msk [vmem:[#allocation2 + $0x30] sm:$0xff] %vm2859, %v2824
      %2867 = vst.msk [vmem:[#allocation2 + $0x38] sm:$0xff] %vm2859, %v2826
      %2868 = vst.msk [vmem:[#allocation2 + $0x40] sm:$0xff] %vm2859, %v2828
      %2869 = vst.msk [vmem:[#allocation2 + $0x48] sm:$0xff] %vm2859, %v2830
      %2870 = vst.msk [vmem:[#allocation2 + $0x50] sm:$0xff] %vm2859, %v2832
      %2871 = vst.msk [vmem:[#allocation2 + $0x58] sm:$0xff] %vm2859, %v2834
      %2872 = vst.msk [vmem:[#allocation2 + $0x60] sm:$0xff] %vm2859, %v2836
      %2873 = vst.msk [vmem:[#allocation2 + $0x68] sm:$0xff] %vm2859, %v2838
      %2874 = vst.msk [vmem:[#allocation2 + $0x70] sm:$0xff] %vm2859, %v2840
      %2875 = vst.msk [vmem:[#allocation2 + $0x78] sm:$0xff] %vm2859, %v2842
      %v2876 = vld [vmem:[#allocation2] sm:$0xff]
      %v2877 = vld [vmem:[#allocation2 + $0x8] sm:$0xff]
      %v2878 = vld [vmem:[#allocation2 + $0x10] sm:$0xff]
      %v2879 = vld [vmem:[#allocation2 + $0x18] sm:$0xff]
      %v2880 = vld [vmem:[#allocation2 + $0x20] sm:$0xff]
      %v2881 = vld [vmem:[#allocation2 + $0x28] sm:$0xff]
      %v2882 = vld [vmem:[#allocation2 + $0x30] sm:$0xff]
      %v2883 = vld [vmem:[#allocation2 + $0x38] sm:$0xff]
      %v2884 = vld [vmem:[#allocation2 + $0x40] sm:$0xff]
      %v2885 = vld [vmem:[#allocation2 + $0x48] sm:$0xff]
      %v2886 = vld [vmem:[#allocation2 + $0x50] sm:$0xff]
      %v2887 = vld [vmem:[#allocation2 + $0x58] sm:$0xff]
      %v2888 = vld [vmem:[#allocation2 + $0x60] sm:$0xff]
      %v2889 = vld [vmem:[#allocation2 + $0x68] sm:$0xff]
      %v2890 = vld [vmem:[#allocation2 + $0x70] sm:$0xff]
      %v2891 = vld [vmem:[#allocation2 + $0x78] sm:$0xff]
      %v2892 = vld [vmem:[%s1] sm:$0xf]
      %v2893 = vld [vmem:[%s1 + $0x4] sm:$0xf]
      %v2894 = vld [vmem:[%s1 + $0x8] sm:$0xf]
      %v2895 = vld [vmem:[%s1 + $0xc] sm:$0xf]
      %v2896 = vld [vmem:[%s1 + $0x10] sm:$0x3]
      %v2897 = vld [vmem:[%s2] sm:$0x1]
      %v2899 = vlaneseq
      %v2900 = vshrl.u32 %v2899, 7
      %v2901 = vsub.s32 0, %v2900
      %v2902 = vrot.slane %v2897, %v2901
      %v2909 = vunpack.c.l.b16 %v2892
      %v2910 = vunpack.c.l.b16 %v2893
      %v2911 = vunpack.c.l.b16 %v2894
      %v2912 = vunpack.c.l.b16 %v2895
      %v2913 = vunpack.c.l.b16 %v2896
      %v2914 = vpack.c.b16 %v2910, %v2909
      %v2915 = vpack.c.b16 %v2912, %v2911
      %v2916 = vpack.c.b16 %v2913, %v2913
      %vm2919 = vcmask 293888
      %v2921 = vsel %vm2919, %v2876, 0
      %v2924 = vsel %vm2919, %v2877, 0
      %v2927 = vsel %vm2919, %v2878, 0
      %v2930 = vsel %vm2919, %v2879, 0
      %v2933 = vsel %vm2919, %v2880, 0
      %v2936 = vsel %vm2919, %v2881, 0
      %v2939 = vsel %vm2919, %v2882, 0
      %v2942 = vsel %vm2919, %v2883, 0
      %v2945 = vsel %vm2919, %v2884, 0
      %v2948 = vsel %vm2919, %v2885, 0
      %v2951 = vsel %vm2919, %v2886, 0
      %v2954 = vsel %vm2919, %v2887, 0
      %v2957 = vsel %vm2919, %v2888, 0
      %v2960 = vsel %vm2919, %v2889, 0
      %v2963 = vsel %vm2919, %v2890, 0
      %v2966 = vsel %vm2919, %v2891, 0
      %vm2968 = vcmask 1041408
      %v2970 = vsel %vm2968, %v2916, 0
      %2972 = vmatprep.subr.bf16.mxu0 0
      %2973 = vmatpush1.bf16.msra.mxu0 %v2914
      %2974 = vmatprep.subr.bf16.mxu0 0
      %2975 = vmatpush1.bf16.msra.mxu0 %v2915
      %2976 = vmatprep.subr.bf16.mxu0 0
      %2977 = vmatpush1.bf16.msra.mxu0 %v2970
      %2978 = vmatprep.subr.bf16.mxu0 0
      %2979 = vmatpush1.bf16.msra.mxu0 0
      %2980 = vmatprep.subr.bf16.mxu0 0
      %2981 = vmatpush1.bf16.msra.mxu0 0
      %2982 = vmatprep.subr.bf16.mxu0 0
      %2983 = vmatpush1.bf16.msra.mxu0 0
      %2984 = vmatprep.subr.bf16.mxu0 0
      %2985 = vmatpush1.bf16.msra.mxu0 0
      %2986 = vmatprep.subr.bf16.mxu0 0
      %2987 = vmatpush1.bf16.msra.mxu0 0
      %2988 = vmatprep.subr.bf16.mxu0 0
      %2989 = vmatpush1.bf16.msra.mxu0 0
      %2990 = vmatprep.subr.bf16.mxu0 0
      %2991 = vmatpush1.bf16.msra.mxu0 0
      %2992 = vmatprep.subr.bf16.mxu0 0
      %2993 = vmatpush1.bf16.msra.mxu0 0
      %2994 = vmatprep.subr.bf16.mxu0 0
      %2995 = vmatpush1.bf16.msra.mxu0 0
      %2996 = vmatprep.subr.bf16.mxu0 0
      %2997 = vmatpush1.bf16.msra.mxu0 0
      %2998 = vmatprep.subr.bf16.mxu0 0
      %2999 = vmatpush1.bf16.msra.mxu0 0
      %3000 = vmatprep.subr.bf16.mxu0 0
      %3001 = vmatpush1.bf16.msra.mxu0 0
      %3002 = vmatprep.subr.bf16.mxu0 0
      %3003 = vmatpush1.bf16.msra.mxu0 0
      %3004 = vmatprep.mubr.bf16.mxu0 0
      %3005 = vmatmul.mubr.bf16.gmra.mrb[0].mxu0 %v2921
      %v3006 = vpop.f32.mrb[0].mxu0
      %v3007 = vadd.f32 %v2902, %v3006
      %v3008 = vpop.f32.mrb[0].mxu0
      %v3009 = vpop.f32.mrb[0].mxu0
      %v3010 = vadd.f32 %v2902, %v3009
      %v3011 = vpop.f32.mrb[0].mxu0
      %3012 = vmatprep.mubr.bf16.mxu0 0
      %3013 = vmatmul.mubr.bf16.gmra.mrb[0].mxu0 %v2924
      %v3014 = vpop.f32.mrb[0].mxu0
      %v3015 = vadd.f32 %v2902, %v3014
      %v3016 = vpop.f32.mrb[0].mxu0
      %v3017 = vpop.f32.mrb[0].mxu0
      %v3018 = vadd.f32 %v2902, %v3017
      %v3019 = vpop.f32.mrb[0].mxu0
      %3020 = vmatprep.mubr.bf16.mxu0 0
      %3021 = vmatmul.mubr.bf16.gmra.mrb[0].mxu0 %v2927
      %v3022 = vpop.f32.mrb[0].mxu0
      %v3023 = vadd.f32 %v2902, %v3022
      %v3024 = vpop.f32.mrb[0].mxu0
      %v3025 = vpop.f32.mrb[0].mxu0
      %v3026 = vadd.f32 %v2902, %v3025
      %v3027 = vpop.f32.mrb[0].mxu0
      %3028 = vmatprep.mubr.bf16.mxu0 0
      %3029 = vmatmul.mubr.bf16.gmra.mrb[0].mxu0 %v2930
      %v3030 = vpop.f32.mrb[0].mxu0
      %v3031 = vadd.f32 %v2902, %v3030
      %v3032 = vpop.f32.mrb[0].mxu0
      %v3033 = vpop.f32.mrb[0].mxu0
      %v3034 = vadd.f32 %v2902, %v3033
      %v3035 = vpop.f32.mrb[0].mxu0
      %3036 = vmatprep.mubr.bf16.mxu0 0
      %3037 = vmatmul.mubr.bf16.gmra.mrb[0].mxu0 %v2933
      %v3038 = vpop.f32.mrb[0].mxu0
      %v3039 = vadd.f32 %v2902, %v3038
      %v3040 = vpop.f32.mrb[0].mxu0
      %v3041 = vpop.f32.mrb[0].mxu0
      %v3042 = vadd.f32 %v2902, %v3041
      %v3043 = vpop.f32.mrb[0].mxu0
      %3044 = vmatprep.mubr.bf16.mxu0 0
      %3045 = vmatmul.mubr.bf16.gmra.mrb[0].mxu0 %v2936
      %v3046 = vpop.f32.mrb[0].mxu0
      %v3047 = vadd.f32 %v2902, %v3046
      %v3048 = vpop.f32.mrb[0].mxu0
      %v3049 = vpop.f32.mrb[0].mxu0
      %v3050 = vadd.f32 %v2902, %v3049
      %v3051 = vpop.f32.mrb[0].mxu0
      %3052 = vmatprep.mubr.bf16.mxu0 0
      %3053 = vmatmul.mubr.bf16.gmra.mrb[0].mxu0 %v2939
      %v3054 = vpop.f32.mrb[0].mxu0
      %v3055 = vadd.f32 %v2902, %v3054
      %v3056 = vpop.f32.mrb[0].mxu0
      %v3057 = vpop.f32.mrb[0].mxu0
      %v3058 = vadd.f32 %v2902, %v3057
      %v3059 = vpop.f32.mrb[0].mxu0
      %3060 = vmatprep.mubr.bf16.mxu0 0
      %3061 = vmatmul.mubr.bf16.gmra.mrb[0].mxu0 %v2942
      %v3062 = vpop.f32.mrb[0].mxu0
      %v3063 = vadd.f32 %v2902, %v3062
      %v3064 = vpop.f32.mrb[0].mxu0
      %v3065 = vpop.f32.mrb[0].mxu0
      %v3066 = vadd.f32 %v2902, %v3065
      %v3067 = vpop.f32.mrb[0].mxu0
      %3068 = vmatprep.mubr.bf16.mxu0 0
      %3069 = vmatmul.mubr.bf16.gmra.mrb[0].mxu0 %v2945
      %v3070 = vpop.f32.mrb[0].mxu0
      %v3071 = vadd.f32 %v2902, %v3070
      %v3072 = vpop.f32.mrb[0].mxu0
      %v3073 = vpop.f32.mrb[0].mxu0
      %v3074 = vadd.f32 %v2902, %v3073
      %v3075 = vpop.f32.mrb[0].mxu0
      %3076 = vmatprep.mubr.bf16.mxu0 0
      %3077 = vmatmul.mubr.bf16.gmra.mrb[0].mxu0 %v2948
      %v3078 = vpop.f32.mrb[0].mxu0
      %v3079 = vadd.f32 %v2902, %v3078
      %v3080 = vpop.f32.mrb[0].mxu0
      %v3081 = vpop.f32.mrb[0].mxu0
      %v3082 = vadd.f32 %v2902, %v3081
      %v3083 = vpop.f32.mrb[0].mxu0
      %3084 = vmatprep.mubr.bf16.mxu0 0
      %3085 = vmatmul.mubr.bf16.gmra.mrb[0].mxu0 %v2951
      %v3086 = vpop.f32.mrb[0].mxu0
      %v3087 = vadd.f32 %v2902, %v3086
      %v3088 = vpop.f32.mrb[0].mxu0
      %v3089 = vpop.f32.mrb[0].mxu0
      %v3090 = vadd.f32 %v2902, %v3089
      %v3091 = vpop.f32.mrb[0].mxu0
      %3092 = vmatprep.mubr.bf16.mxu0 0
      %3093 = vmatmul.mubr.bf16.gmra.mrb[0].mxu0 %v2954
      %v3094 = vpop.f32.mrb[0].mxu0
      %v3095 = vadd.f32 %v2902, %v3094
      %v3096 = vpop.f32.mrb[0].mxu0
      %v3097 = vpop.f32.mrb[0].mxu0
      %v3098 = vadd.f32 %v2902, %v3097
      %v3099 = vpop.f32.mrb[0].mxu0
      %3100 = vmatprep.mubr.bf16.mxu0 0
      %3101 = vmatmul.mubr.bf16.gmra.mrb[0].mxu0 %v2957
      %v3102 = vpop.f32.mrb[0].mxu0
      %v3103 = vadd.f32 %v2902, %v3102
      %v3104 = vpop.f32.mrb[0].mxu0
      %v3105 = vpop.f32.mrb[0].mxu0
      %v3106 = vadd.f32 %v2902, %v3105
      %v3107 = vpop.f32.mrb[0].mxu0
      %3108 = vmatprep.mubr.bf16.mxu0 0
      %3109 = vmatmul.mubr.bf16.gmra.mrb[0].mxu0 %v2960
      %v3110 = vpop.f32.mrb[0].mxu0
      %v3111 = vadd.f32 %v2902, %v3110
      %v3112 = vpop.f32.mrb[0].mxu0
      %v3113 = vpop.f32.mrb[0].mxu0
      %v3114 = vadd.f32 %v2902, %v3113
      %v3115 = vpop.f32.mrb[0].mxu0
      %3116 = vmatprep.mubr.bf16.mxu0 0
      %3117 = vmatmul.mubr.bf16.gmra.mrb[0].mxu0 %v2963
      %v3118 = vpop.f32.mrb[0].mxu0
      %v3119 = vadd.f32 %v2902, %v3118
      %v3120 = vpop.f32.mrb[0].mxu0
      %v3121 = vpop.f32.mrb[0].mxu0
      %v3122 = vadd.f32 %v2902, %v3121
      %v3123 = vpop.f32.mrb[0].mxu0
      %3124 = vmatprep.mubr.bf16.mxu0 0
      %3125 = vmatmul.mubr.bf16.gmra.mrb[0].mxu0 %v2966
      %v3126 = vpop.f32.mrb[0].mxu0
      %v3127 = vadd.f32 %v2902, %v3126
      %v3128 = vpop.f32.mrb[0].mxu0
      %v3129 = vpop.f32.mrb[0].mxu0
      %v3130 = vadd.f32 %v2902, %v3129
      %v3131 = vpop.f32.mrb[0].mxu0
      %3132 = vdwg.mxu0
      %v3133 = vmax.f32 %v3007, 0.0
      %v3134 = vmax.f32 %v3010, 0.0
      %v3135 = vmax.f32 %v3015, 0.0
      %v3136 = vmax.f32 %v3018, 0.0
      %v3137 = vmax.f32 %v3023, 0.0
      %v3138 = vmax.f32 %v3026, 0.0
      %v3139 = vmax.f32 %v3031, 0.0
      %v3140 = vmax.f32 %v3034, 0.0
      %v3141 = vmax.f32 %v3039, 0.0
      %v3142 = vmax.f32 %v3042, 0.0
      %v3143 = vmax.f32 %v3047, 0.0
      %v3144 = vmax.f32 %v3050, 0.0
      %v3145 = vmax.f32 %v3055, 0.0
      %v3146 = vmax.f32 %v3058, 0.0
      %v3147 = vmax.f32 %v3063, 0.0
      %v3148 = vmax.f32 %v3066, 0.0
      %v3149 = vmax.f32 %v3071, 0.0
      %v3150 = vmax.f32 %v3074, 0.0
      %v3151 = vmax.f32 %v3079, 0.0
      %v3152 = vmax.f32 %v3082, 0.0
      %v3153 = vmax.f32 %v3087, 0.0
      %v3154 = vmax.f32 %v3090, 0.0
      %v3155 = vmax.f32 %v3095, 0.0
      %v3156 = vmax.f32 %v3098, 0.0
      %v3157 = vmax.f32 %v3103, 0.0
      %v3158 = vmax.f32 %v3106, 0.0
      %v3159 = vmax.f32 %v3111, 0.0
      %v3160 = vmax.f32 %v3114, 0.0
      %v3161 = vmax.f32 %v3119, 0.0
      %v3162 = vmax.f32 %v3122, 0.0
      %v3163 = vmax.f32 %v3127, 0.0
      %v3164 = vmax.f32 %v3130, 0.0
      %vm3165 = vcmask 64512
      %3166 = vst.msk [vmem:[%s194] sm:$0xff] %vm3165, %v3133
      %3167 = vst.msk [vmem:[%s194 + $0x8] sm:$0xff] %vm3165, %v3134
      %3168 = vst.msk [vmem:[%s194 + $0x10] sm:$0xff] %vm3165, %v3135
      %3169 = vst.msk [vmem:[%s194 + $0x18] sm:$0xff] %vm3165, %v3136
      %3170 = vst.msk [vmem:[%s194 + $0x20] sm:$0xff] %vm3165, %v3137
      %3171 = vst.msk [vmem:[%s194 + $0x28] sm:$0xff] %vm3165, %v3138
      %3172 = vst.msk [vmem:[%s194 + $0x30] sm:$0xff] %vm3165, %v3139
      %3173 = vst.msk [vmem:[%s194 + $0x38] sm:$0xff] %vm3165, %v3140
      %3174 = vst.msk [vmem:[%s194 + $0x40] sm:$0xff] %vm3165, %v3141
      %3175 = vst.msk [vmem:[%s194 + $0x48] sm:$0xff] %vm3165, %v3142
      %3176 = vst.msk [vmem:[%s194 + $0x50] sm:$0xff] %vm3165, %v3143
      %3177 = vst.msk [vmem:[%s194 + $0x58] sm:$0xff] %vm3165, %v3144
      %3178 = vst.msk [vmem:[%s194 + $0x60] sm:$0xff] %vm3165, %v3145
      %3179 = vst.msk [vmem:[%s194 + $0x68] sm:$0xff] %vm3165, %v3146
      %3180 = vst.msk [vmem:[%s194 + $0x70] sm:$0xff] %vm3165, %v3147
      %3181 = vst.msk [vmem:[%s194 + $0x78] sm:$0xff] %vm3165, %v3148
      %3182 = vst.msk [vmem:[%s194 + $0x80] sm:$0xff] %vm3165, %v3149
      %3183 = vst.msk [vmem:[%s194 + $0x88] sm:$0xff] %vm3165, %v3150
      %3184 = vst.msk [vmem:[%s194 + $0x90] sm:$0xff] %vm3165, %v3151
      %3185 = vst.msk [vmem:[%s194 + $0x98] sm:$0xff] %vm3165, %v3152
      %3186 = vst.msk [vmem:[%s194 + $0xa0] sm:$0xff] %vm3165, %v3153
      %3187 = vst.msk [vmem:[%s194 + $0xa8] sm:$0xff] %vm3165, %v3154
      %3188 = vst.msk [vmem:[%s194 + $0xb0] sm:$0xff] %vm3165, %v3155
      %3189 = vst.msk [vmem:[%s194 + $0xb8] sm:$0xff] %vm3165, %v3156
      %3190 = vst.msk [vmem:[%s194 + $0xc0] sm:$0xff] %vm3165, %v3157
      %3191 = vst.msk [vmem:[%s194 + $0xc8] sm:$0xff] %vm3165, %v3158
      %3192 = vst.msk [vmem:[%s194 + $0xd0] sm:$0xff] %vm3165, %v3159
      %3193 = vst.msk [vmem:[%s194 + $0xd8] sm:$0xff] %vm3165, %v3160
      %3194 = vst.msk [vmem:[%s194 + $0xe0] sm:$0xff] %vm3165, %v3161
      %3195 = vst.msk [vmem:[%s194 + $0xe8] sm:$0xff] %vm3165, %v3162
      %3196 = vst.msk [vmem:[%s194 + $0xf0] sm:$0xff] %vm3165, %v3163
      %3197 = vst.msk [vmem:[%s194 + $0xf8] sm:$0xff] %vm3165, %v3164
      %s3198 = smul.u32 16, %s19
      %p3199 = scmp.lt.s32.totalorder %s18, 1
      %s3200 = scalar_select %p3199, %s18, 1
      %p3201 = scmp.lt.s32.totalorder %s3198, 15
      %s3202 = scalar_select %p3201, %s3198, 15
      %s3203 = smul.addr %s3202, 2
      %s3204 = smul.addr %s3200, 32
      %s3205 = sadd.s32 %s3203, %s3204
      %s3206 = smul.addr %s3205, 8
      %s3207 = scalar_lea.vmem %s3, %s3206
      // Predicated region
      $region33: #{cbr_forward.1} parent=31 // pred_check
        %p3208 = pneg %p114
      $region34: #{cbr_forward.1} parent=31 // pred_check_branch
        %3210 = sbr.rel (%p3208) target = $region36
      $region35: #{cbr_forward.1} parent=31 // pred_region
        %s3211 = smul.u32 16, %s19
      $region36: #{cbr_forward.1} parent=31 // pred_fallthru
        _
    $region32: #{cbr_forward.1} parent=5 // pred_fallthru
      _
    %p3212 = scmp.le.s32.totalorder 2, %s9
    // Predicated region
    $region37: #{cbr_forward.1} parent=5 // pred_check
      %p3213 = pneg %p3212
    $region38: #{cbr_forward.1} parent=5 // pred_check_branch
      %3215 = sbr.rel (%p3213) target = $region40
    $region39: #{cbr_forward.1} parent=5 // pred_region
      %s3216 = ssub.s32 %s9, 2
      // Predicated region
      $region41: #{cbr_forward.1} parent=39 // pred_check
        %p3217 = pneg %p120
      $region42: #{cbr_forward.1} parent=39 // pred_check_branch
        %3219 = sbr.rel (%p3217) target = $region44
      $region43: #{cbr_forward.1} parent=39 // pred_region
        %s3220 = smul.u32 16, %s21
        %p3221 = scmp.lt.s32.totalorder %s20, 1
        %s3222 = scalar_select %p3221, %s20, 1
        %p3223 = scmp.lt.s32.totalorder %s3220, 15
        %s3224 = scalar_select %p3223, %s3220, 15
        %s3225 = smul.addr %s3224, 2
        %s3226 = smul.addr %s3222, 32
        %s3227 = sadd.s32 %s3225, %s3226
        %s3228 = smul.addr %s3227, 8
        %s3229 = scalar_lea.vmem %s3, %s3228
      $region44: #{cbr_forward.1} parent=39 // pred_fallthru
        _
    $region40: #{cbr_forward.1} parent=5 // pred_fallthru
      _
  $region6: #{cbr_forward.1} parent=0 // loop_footer
    %s13 = sadd.s32 1, %s9
  $region7: #{cbr_forward.1} parent=0 // loop_footer_branch
    %8 = sbr.rel target = $region3
  $region8: #{cbr_forward.1} parent=0 // loop_exit
    _

</llo_original>
